<compile_context>
chip_gen: v6e
topology: v6e:2x2x1
jax: 0.10.0
libtpu: 0.0.40
codegen_flags: <defaults>
</compile_context>

<pallas_src>
import jax
import jax.numpy as jnp
from jax import lax
from jax.experimental import pallas as pl
from jax.experimental.pallas import tpu as pltpu

_HIGHEST = lax.Precision.HIGHEST   # fp32 contract precision on the MXU


def _gated(x_ref, pm_ref, w_ref, b_ref):
    """y = sigmoid(GroupConv1x1(AvgPool2d(x))) * x for one (b, c) tile, f32.

    x_ref : (D, H*W)     activation tile, lane-dense
    pm_ref: (H*W, H*W)   pooling operator kron(S_H, S_W) / k^2 (grid-resident)
    w_ref : (D, D)       grouped-1x1-conv weights of group c
    b_ref : (D, 1)       bias of group c
    """
    xf = x_ref[...].astype(jnp.float32)
    # AvgPool2d as a single MXU matmul (no padded scratch, no unaligned slices).
    pooled = jnp.dot(xf, pm_ref[...],
                     preferred_element_type=jnp.float32, precision=_HIGHEST)
    # Grouped 1x1 conv over band_num: second MXU matmul.
    conv = jnp.dot(w_ref[...], pooled,
                   preferred_element_type=jnp.float32, precision=_HIGHEST)
    gate = jax.nn.sigmoid(conv + b_ref[...])            # EUP
    return gate * xf


def _stats_kernel(x_ref, pm_ref, w_ref, b_ref, s_ref, ss_ref):
    """Pass 1: per-(b, c) sum / sum-of-squares of y for BatchNorm batch stats."""
    y = _gated(x_ref, pm_ref, w_ref, b_ref)
    s_ref[...] = jnp.sum(y, keepdims=True)
    ss_ref[...] = jnp.sum(y * y, keepdims=True)


def _out_kernel(x_ref, pm_ref, w_ref, b_ref, scale_ref, shift_ref, o_ref):
    """Pass 2: recompute y (avoids a full y HBM round trip) and fuse BN + ReLU.
    Output block is lane-dense (last dim = H*W, multiple of 128)."""
    c = pl.program_id(1)
    y = _gated(x_ref, pm_ref, w_ref, b_ref)
    o_ref[...] = jnp.maximum(y * scale_ref[c] + shift_ref[c], 0.0).astype(o_ref.dtype)


def spe_attention_3d(x, conv_w, conv_b, gamma, beta, *, spa_pool_size=3, eps=1e-5):
    B, C, D, H, W = x.shape
    K = spa_pool_size
    P = K // 2
    # Odd pool size is required so AvgPool2d output spatial == input spatial
    # (otherwise the PyTorch module's reshape back to inputx.shape would fail).
    assert K % 2 == 1
    HW = H * W

    # Banded separable pooling operator (zero pad, count_include_pad=True):
    #   pooled_flat = x_flat @ pool_mat,  pool_mat = kron(S_H, S_W) / K^2,
    #   S_A[i, j] = 1 iff |i - j| <= P.   Built once in the wrapper (tiny).
    ih = jnp.arange(H)
    iw = jnp.arange(W)
    s_h = (jnp.abs(ih[:, None] - ih[None, :]) <= P).astype(jnp.float32)
    s_w = (jnp.abs(iw[:, None] - iw[None, :]) <= P).astype(jnp.float32)
    pool_mat = jnp.kron(s_h, s_w) * (1.0 / float(K * K))        # (HW, HW)

    x_flat = x.reshape(B, C, D, HW)                              # lane-dense view
    w3 = conv_w.astype(jnp.float32)                              # (C, D, D) [group, out, in]
    b3 = conv_b.astype(jnp.float32).reshape(C, D, 1)             # (C, D, 1)

    x_spec = pl.BlockSpec((None, None, D, HW), lambda b, c: (b, c, 0, 0))
    pm_spec = pl.BlockSpec((HW, HW), lambda b, c: (0, 0))        # resident across grid
    w_spec = pl.BlockSpec((None, D, D), lambda b, c: (c, 0, 0))
    b_spec = pl.BlockSpec((None, D, 1), lambda b, c: (c, 0, 0))
    st_spec = pl.BlockSpec((None, None, 1, 1), lambda b, c: (b, c, 0, 0))
    smem_spec = pl.BlockSpec(memory_space=pltpu.MemorySpace.SMEM)

    params = pltpu.CompilerParams(dimension_semantics=("parallel", "parallel"))

    # Pass 1: per-(b, c) partial sums of y = gate * x (stats only, no y output).
    s, ss = pl.pallas_call(
        _stats_kernel,
        out_shape=(
            jax.ShapeDtypeStruct((B, C, 1, 1), jnp.float32),
            jax.ShapeDtypeStruct((B, C, 1, 1), jnp.float32),
        ),
        grid_spec=pltpu.PrefetchScalarGridSpec(
            num_scalar_prefetch=0,
            grid=(B, C),
            in_specs=[x_spec, pm_spec, w_spec, b_spec],
            out_specs=[st_spec, st_spec],
        ),
        compiler_params=params,
    )(x_flat, pool_mat, w3, b3)

    # BatchNorm3d training-mode statistics per in_ch (biased variance); tiny
    # (C,)-sized finish in plain JAX, f32 accumulators.
    n = B * D * H * W
    mean = jnp.sum(s[:, :, 0, 0], axis=0) / n
    var = jnp.maximum(jnp.sum(ss[:, :, 0, 0], axis=0) / n - mean * mean, 0.0)
    scale = gamma.astype(jnp.float32) * lax.rsqrt(var + eps)
    shift = beta.astype(jnp.float32) - mean * scale
    # TODO(synk): BatchNorm3d running_mean/running_var buffer updates (stateful
    # training side effect) are not modeled; they do not affect this forward's output.

    # Pass 2: recompute gate + fuse BN + ReLU, lane-dense output blocks.
    out_flat = pl.pallas_call(
        _out_kernel,
        out_shape=jax.ShapeDtypeStruct((B, C, D, HW), jnp.float32),
        grid_spec=pltpu.PrefetchScalarGridSpec(
            num_scalar_prefetch=0,
            grid=(B, C),
            in_specs=[x_spec, pm_spec, w_spec, b_spec, smem_spec, smem_spec],
            out_specs=x_spec,
        ),
        compiler_params=params,
    )(x_flat, pool_mat, w3, b3, scale, shift)

    return out_flat.reshape(B, C, D, H, W)


def reference(x, conv_w, conv_b, gamma, beta, *, spa_pool_size=3, eps=1e-5):
    """Pure-JAX mirror of the PyTorch forward (training-mode BN)."""
    B, C, D, H, W = x.shape
    K = spa_pool_size
    P = K // 2
    x2 = x.reshape(B, C * D, H, W)
    xp = jnp.pad(x2, ((0, 0), (0, 0), (P, P), (P, P)))
    pooled = jnp.zeros_like(x2)
    for di in range(K):
        for dj in range(K):
            pooled = pooled + xp[:, :, di:di + H, dj:dj + W]
    pooled = (pooled / (K * K)).reshape(B, C, D, H, W)
    conv = jnp.einsum("coi,bcihw->bcohw", conv_w, pooled, precision=_HIGHEST)
    conv = conv + conv_b[None, :, :, None, None]
    y = jax.nn.sigmoid(conv) * x
    mean = jnp.mean(y, axis=(0, 2, 3, 4), keepdims=True)
    var = jnp.mean((y - mean) ** 2, axis=(0, 2, 3, 4), keepdims=True)
    yh = (y - mean) * lax.rsqrt(var + eps)
    out = gamma[None, :, None, None, None] * yh + beta[None, :, None, None, None]
    return jnp.maximum(out, 0.0)


if __name__ == "__main__":
    B, C, D, H, W = 2, 4, 8, 16, 16      # batch, in_ch, band_num, spatial
    spa_pool_size = 3

    key = jax.random.PRNGKey(0)
    kx, kw, kb, kg, kbe = jax.random.split(key, 5)
    x = jax.random.normal(kx, (B, C, D, H, W), jnp.float32)
    # Grouped 1x1 conv: PyTorch weight (C*D, D, 1, 1) stored here as (C, D, D).
    conv_w = 0.2 * jax.random.normal(kw, (C, D, D), jnp.float32)
    conv_b = 0.1 * jax.random.normal(kb, (C, D), jnp.float32)
    gamma = 1.0 + 0.1 * jax.random.normal(kg, (C,), jnp.float32)
    beta = 0.1 * jax.random.normal(kbe, (C,), jnp.float32)

    out = spe_attention_3d(x, conv_w, conv_b, gamma, beta,
                           spa_pool_size=spa_pool_size)
    out = jax.block_until_ready(out)

    ref = jax.block_until_ready(
        reference(x, conv_w, conv_b, gamma, beta, spa_pool_size=spa_pool_size))
    assert out.shape == x.shape and out.dtype == jnp.float32
    max_err = float(jnp.max(jnp.abs(out - ref)))
    if max_err > 2e-3:
        raise AssertionError(f"mismatch vs reference, max_err={max_err}")
    print("KERNEL_OK")
</pallas_src>

<mosaic_0001>
module attributes {stable_mosaic.version = 11 : i64} {
  func.func @_stats_kernel(%arg0: i32, %arg1: i32, %arg2: memref<1x1x8x256xf32, #tpu.memory_space<vmem>>, %arg3: memref<256x256xf32, #tpu.memory_space<vmem>>, %arg4: memref<1x8x8xf32, #tpu.memory_space<vmem>>, %arg5: memref<1x8x1xf32, #tpu.memory_space<vmem>>, %arg6: memref<1x1x1x1xf32, #tpu.memory_space<vmem>>, %arg7: memref<1x1x1x1xf32, #tpu.memory_space<vmem>>) attributes {dimension_semantics = [#tpu.dimension_semantics<parallel>, #tpu.dimension_semantics<parallel>], iteration_bounds = array<i64: 2, 4>, scalar_prefetch = 0 : i64, scratch_operands = 0 : i64, tpu.core_type = #tpu.core_type<tc>, window_params = [{transform_indices = @transform_0, window_bounds = array<i64: 1, 1, 8, 256>}, {pipeline_mode = #tpu.pipeline_mode<synchronous>, transform_indices = @transform_1, window_bounds = array<i64: 256, 256>}, {transform_indices = @transform_2, window_bounds = array<i64: 1, 8, 8>}, {transform_indices = @transform_3, window_bounds = array<i64: 1, 8, 1>}, {transform_indices = @transform_4, window_bounds = array<i64: 1, 1, 1, 1>}, {transform_indices = @transform_5, window_bounds = array<i64: 1, 1, 1, 1>}]} {
    %c0 = arith.constant 0 : index
    %c0_0 = arith.constant 0 : index
    %c0_1 = arith.constant 0 : index
    %c0_2 = arith.constant 0 : index
    %0 = vector.load %arg2[%c0, %c0_0, %c0_1, %c0_2] : memref<1x1x8x256xf32, #tpu.memory_space<vmem>>, vector<1x1x8x256xf32>
    %1 = vector.shape_cast %0 : vector<1x1x8x256xf32> to vector<8x256xf32>
    %c0_3 = arith.constant 0 : index
    %c0_4 = arith.constant 0 : index
    %2 = vector.load %arg3[%c0_3, %c0_4] : memref<256x256xf32, #tpu.memory_space<vmem>>, vector<256x256xf32>
    %cst = arith.constant dense<0.000000e+00> : vector<8x256xf32>
    %3 = tpu.matmul %1, %2, %cst {dimension_numbers = #tpu.dot_dimension_numbers<[1], [0], [0], [1], [0, 0, 1, 1], [], []>, precision = #tpu.contract_precision<fp32>} : vector<8x256xf32>, vector<256x256xf32>, vector<8x256xf32> -> vector<8x256xf32>
    %c0_5 = arith.constant 0 : index
    %c0_6 = arith.constant 0 : index
    %c0_7 = arith.constant 0 : index
    %4 = vector.load %arg4[%c0_5, %c0_6, %c0_7] : memref<1x8x8xf32, #tpu.memory_space<vmem>>, vector<1x8x8xf32>
    %5 = vector.shape_cast %4 : vector<1x8x8xf32> to vector<8x8xf32>
    %cst_8 = arith.constant dense<0.000000e+00> : vector<8x256xf32>
    %6 = tpu.matmul %5, %3, %cst_8 {dimension_numbers = #tpu.dot_dimension_numbers<[1], [0], [0], [1], [0, 0, 1, 1], [], []>, precision = #tpu.contract_precision<fp32>} : vector<8x8xf32>, vector<8x256xf32>, vector<8x256xf32> -> vector<8x256xf32>
    %c0_9 = arith.constant 0 : index
    %c0_10 = arith.constant 0 : index
    %c0_11 = arith.constant 0 : index
    %7 = vector.load %arg5[%c0_9, %c0_10, %c0_11] : memref<1x8x1xf32, #tpu.memory_space<vmem>>, vector<1x8x1xf32>
    %8 = vector.shape_cast %7 : vector<1x8x1xf32> to vector<8x1xf32>
    %9 = vector.broadcast %8 : vector<8x1xf32> to vector<8x256xf32>
    %10 = arith.addf %6, %9 : vector<8x256xf32>
    %11 = arith.negf %10 : vector<8x256xf32>
    %12 = math.exp %11 : vector<8x256xf32>
    %cst_12 = arith.constant 1.000000e+00 : f32
    %13 = vector.broadcast %cst_12 : f32 to vector<8x256xf32>
    %14 = arith.addf %13, %12 : vector<8x256xf32>
    %15 = arith.divf %13, %14 : vector<8x256xf32>
    %16 = arith.mulf %15, %1 : vector<8x256xf32>
    %17 = vector.shape_cast %16 : vector<8x256xf32> to vector<1x8x256xf32>
    %cst_13 = arith.constant dense<0.000000e+00> : vector<1xf32>
    %18 = vector.multi_reduction <add>, %17, %cst_13 [1, 2] : vector<1x8x256xf32> to vector<1xf32>
    %19 = vector.shape_cast %18 : vector<1xf32> to vector<1x1x1xf32>
    %20 = vector.extract %19[0, 0, 0] : f32 from vector<1x1x1xf32>
    %21 = vector.broadcast %20 : f32 to vector<1x1xf32>
    %c0_14 = arith.constant 0 : index
    %c0_15 = arith.constant 0 : index
    %c0_16 = arith.constant 0 : index
    %c0_17 = arith.constant 0 : index
    %22 = vector.load %arg6[%c0_14, %c0_15, %c0_16, %c0_17] : memref<1x1x1x1xf32, #tpu.memory_space<vmem>>, vector<1x1x1x1xf32>
    %23 = vector.shape_cast %22 : vector<1x1x1x1xf32> to vector<1x1xf32>
    %24 = vector.shape_cast %21 : vector<1x1xf32> to vector<1x1x1x1xf32>
    tpu.vector_store %arg6[%c0_14, %c0_15, %c0_16, %c0_17], %24 {strides = array<i32>} : memref<1x1x1x1xf32, #tpu.memory_space<vmem>>, vector<1x1x1x1xf32>,
    %25 = arith.mulf %16, %16 : vector<8x256xf32>
    %26 = vector.shape_cast %25 : vector<8x256xf32> to vector<1x8x256xf32>
    %cst_18 = arith.constant dense<0.000000e+00> : vector<1xf32>
    %27 = vector.multi_reduction <add>, %26, %cst_18 [1, 2] : vector<1x8x256xf32> to vector<1xf32>
    %28 = vector.shape_cast %27 : vector<1xf32> to vector<1x1x1xf32>
    %29 = vector.extract %28[0, 0, 0] : f32 from vector<1x1x1xf32>
    %30 = vector.broadcast %29 : f32 to vector<1x1xf32>
    %c0_19 = arith.constant 0 : index
    %c0_20 = arith.constant 0 : index
    %c0_21 = arith.constant 0 : index
    %c0_22 = arith.constant 0 : index
    %31 = vector.load %arg7[%c0_19, %c0_20, %c0_21, %c0_22] : memref<1x1x1x1xf32, #tpu.memory_space<vmem>>, vector<1x1x1x1xf32>
    %32 = vector.shape_cast %31 : vector<1x1x1x1xf32> to vector<1x1xf32>
    %33 = vector.shape_cast %30 : vector<1x1xf32> to vector<1x1x1x1xf32>
    tpu.vector_store %arg7[%c0_19, %c0_20, %c0_21, %c0_22], %33 {strides = array<i32>} : memref<1x1x1x1xf32, #tpu.memory_space<vmem>>, vector<1x1x1x1xf32>,
    return
  }
  func.func @transform_0(%arg0: i32, %arg1: i32) -> (i32, i32, i32, i32) {
    %c0_i32 = arith.constant 0 : i32
    %c0_i32_0 = arith.constant 0 : i32
    %c0_i32_1 = arith.constant 0 : i32
    return %arg0, %arg1, %c0_i32, %c0_i32_0 : i32, i32, i32, i32
  }
  func.func @transform_1(%arg0: i32, %arg1: i32) -> (i32, i32) {
    %c0_i32 = arith.constant 0 : i32
    %c0_i32_0 = arith.constant 0 : i32
    %c0_i32_1 = arith.constant 0 : i32
    return %c0_i32, %c0_i32_0 : i32, i32
  }
  func.func @transform_2(%arg0: i32, %arg1: i32) -> (i32, i32, i32) {
    %c0_i32 = arith.constant 0 : i32
    %c0_i32_0 = arith.constant 0 : i32
    %c0_i32_1 = arith.constant 0 : i32
    return %arg1, %c0_i32, %c0_i32_0 : i32, i32, i32
  }
  func.func @transform_3(%arg0: i32, %arg1: i32) -> (i32, i32, i32) {
    %c0_i32 = arith.constant 0 : i32
    %c0_i32_0 = arith.constant 0 : i32
    %c0_i32_1 = arith.constant 0 : i32
    return %arg1, %c0_i32, %c0_i32_0 : i32, i32, i32
  }
  func.func @transform_4(%arg0: i32, %arg1: i32) -> (i32, i32, i32, i32) {
    %c0_i32 = arith.constant 0 : i32
    %c0_i32_0 = arith.constant 0 : i32
    %c0_i32_1 = arith.constant 0 : i32
    return %arg0, %arg1, %c0_i32, %c0_i32_0 : i32, i32, i32, i32
  }
  func.func @transform_5(%arg0: i32, %arg1: i32) -> (i32, i32, i32, i32) {
    %c0_i32 = arith.constant 0 : i32
    %c0_i32_0 = arith.constant 0 : i32
    %c0_i32_1 = arith.constant 0 : i32
    return %arg0, %arg1, %c0_i32, %c0_i32_0 : i32, i32, i32, i32
  }
}

</mosaic_0001>

<llo_original>
// kernel: tpu_custom_call.1
$region0: #{tpu_custom_call.1}
  #allocation0 [shape = 'u32[]', space=smem, size = 0x4, offset = 0x4, fixed_abs, tag = 'smem constant byte address 0x4 - core index']
  #allocation1 [shape = 'u32[144,128]{1,0:T(1,128)}', space=vmem, size = 0x12000, scoped, tag = 'internal scratch']
  %s0 = inlined_call_operand.hbm [shape: f32[2,4,8,256], index: 0, kind: input, shape index: {}]
  %s1 = inlined_call_operand.hbm [shape: f32[256,256], index: 1, kind: input, shape index: {}]
  %s2 = inlined_call_operand.vmem [shape: f32[4,8,8], index: 2, kind: input, shape index: {}]
  %s3 = inlined_call_operand.vmem [shape: f32[4,8,1], index: 3, kind: input, shape index: {}]
  %s4 = inlined_call_operand.vmem [shape: f32[2,4,1,1], index: 4, kind: output, shape index: {0}]
  %s5 = inlined_call_operand.vmem [shape: f32[2,4,1,1], index: 5, kind: output, shape index: {1}]
  %6 = xla_tuple %s4, %s5
  %s7 = sld [smem:[#allocation0]]
  $region65: #{tpu_custom_call.1} parent=0
    _
  %s9 = ssub.s32 1, %s7
  %s10 = scalar_select 0, %s9, %s7
  $region1: #{tpu_custom_call.1} parent=0
    #allocation2 [shape = 'u8[16384]{0}', space=vmem, size = 0x4000, scoped, tag = 'input window, operand 0']
    #allocation3 [shape = 's32[2]{0}', space=sflag, size = 0x8, scoped, tag = 'scoped memory for tpu_custom_call.1']
    #allocation4 [shape = 'u8[262144]{0}', space=vmem, size = 0x40000, scoped, tag = 'input window, operand 1, single buffered']
    #allocation5 [shape = 's32[1]{0}', space=sflag, size = 0x4, scoped, tag = 'scoped memory for tpu_custom_call.1']
    %11 = vsyncpa [#allocation3], 0
    %s12 = scalar_lea.sflag [#allocation3], 1
    %13 = vsyncpa %s12, 0
    %14 = vsyncpa [#allocation5], 0
    loop: start=0, step=1, limit=10
    $region2: #{tpu_custom_call.1} parent=1 // loop_pre_header
      _
    $region3: #{tpu_custom_call.1} parent=1 // loop_header
      %s16 = sphi 0, %s20
      %p17 = scmp.ge.s32.totalorder %s16, 10
      %s23 = sphi 0, %s35
      %s24 = sphi 0, %s31
      %s25 = sphi 0, %s23
      %s26 = sphi 0, %s24
      %s27 = sphi 0, %s25
      %s28 = sphi 0, %s26
      %s40 = sphi 0, %s42
      %s43 = sphi 0, %s40
      %s44 = sphi 0, %s43
      %s60 = sphi 0, %s44
      %s64 = sphi 0, %s64
      %s66 = sphi 0, %s64
      %s67 = sphi 0, %s66
      %s81 = sphi 0, %s67
      %s87 = sphi 0, %s89
      %s90 = sphi 0, %s87
      %s91 = sphi 0, %s90
      %s107 = sphi 0, %s91
      %s113 = sphi 0, %s115
      %s116 = sphi 0, %s113
      %s117 = sphi 0, %s116
      %s133 = sphi 0, %s117
      %s141 = sphi 0, %s143
      %s144 = sphi 0, %s141
      %s145 = sphi 0, %s144
      %s161 = sphi 0, %s145
      %s169 = sphi 0, %s171
      %s172 = sphi 0, %s169
      %s173 = sphi 0, %s172
      %s189 = sphi 0, %s173
    $region4: #{tpu_custom_call.1} parent=1 // loop_header_branch
      %19 = sbr.rel (%p17) target = $region8
    $region5: #{tpu_custom_call.1} parent=1 // loop_body
      %s21 = ssub.s32 %s16, 1
      %s22 = ssub.s32 %s16, 2
      %s29 = sadd.s32 1, %s24
      %p30 = scmp.ge.s32.totalorder %s29, 4
      %s31 = scalar_select %p30, 0, %s29
      %s32 = sadd.s32 1, %s23
      %s33 = scalar_select %p30, %s32, %s23
      %p34 = scmp.ge.s32.totalorder %s33, 2
      %s35 = scalar_select %p34, 0, %s33
      %s36 = ssub.s32 %s23, %s35
      %s37 = ssub.s32 %s24, %s31
      %s38 = sor.u32 %s36, %s37
      %p39 = scmp.eq.s32.totalorder %s38, 0
      %s41 = sadd.s32 %s40, 1
      %s42 = scalar_select %p39, %s40, %s41
      %p45 = pneg %p39
      %p46 = scmp.eq.s32.totalorder %s16, 7
      %p47 = por %p45, %p46
      %p48 = scmp.ne.s32.totalorder %s40, %s43
      %p49 = scmp.eq.s32.totalorder %s16, 0
      %p50 = por %p48, %p49
      %p51 = scmp.ne.s32.totalorder %s40, %s43
      %p52 = scmp.eq.s32.totalorder %s21, 7
      %p53 = por %p51, %p52
      %p54 = scmp.ne.s32.totalorder %s43, %s44
      %p55 = scmp.eq.s32.totalorder %s21, 0
      %p56 = por %p54, %p55
      %p57 = scmp.ne.s32.totalorder %s43, %s44
      %p58 = scmp.eq.s32.totalorder %s22, 7
      %p59 = por %p57, %p58
      %p61 = scmp.ne.s32.totalorder %s44, %s60
      %p62 = scmp.eq.s32.totalorder %s22, 0
      %p63 = por %p61, %p62
      %s65 = sadd.s32 %s64, 1
      %p68 = scmp.eq.s32.totalorder %s16, 7
      %p69 = scmp.ne.s32.totalorder %s64, %s66
      %p70 = scmp.eq.s32.totalorder %s16, 0
      %p71 = por %p69, %p70
      %p72 = scmp.ne.s32.totalorder %s64, %s66
      %p73 = scmp.eq.s32.totalorder %s21, 7
      %p74 = por %p72, %p73
      %p75 = scmp.ne.s32.totalorder %s66, %s67
      %p76 = scmp.eq.s32.totalorder %s21, 0
      %p77 = por %p75, %p76
      %p78 = scmp.ne.s32.totalorder %s66, %s67
      %p79 = scmp.eq.s32.totalorder %s22, 7
      %p80 = por %p78, %p79
      %p82 = scmp.ne.s32.totalorder %s67, %s81
      %p83 = scmp.eq.s32.totalorder %s22, 0
      %p84 = por %p82, %p83
      %s85 = ssub.s32 %s24, %s31
      %p86 = scmp.eq.s32.totalorder %s85, 0
      %s88 = sadd.s32 %s87, 1
      %s89 = scalar_select %p86, %s87, %s88
      %p92 = pneg %p86
      %p93 = scmp.eq.s32.totalorder %s16, 7
      %p94 = por %p92, %p93
      %p95 = scmp.ne.s32.totalorder %s87, %s90
      %p96 = scmp.eq.s32.totalorder %s16, 0
      %p97 = por %p95, %p96
      %p98 = scmp.ne.s32.totalorder %s87, %s90
      %p99 = scmp.eq.s32.totalorder %s21, 7
      %p100 = por %p98, %p99
      %p101 = scmp.ne.s32.totalorder %s90, %s91
      %p102 = scmp.eq.s32.totalorder %s21, 0
      %p103 = por %p101, %p102
      %p104 = scmp.ne.s32.totalorder %s90, %s91
      %p105 = scmp.eq.s32.totalorder %s22, 7
      %p106 = por %p104, %p105
      %p108 = scmp.ne.s32.totalorder %s91, %s107
      %p109 = scmp.eq.s32.totalorder %s22, 0
      %p110 = por %p108, %p109
      %s111 = ssub.s32 %s24, %s31
      %p112 = scmp.eq.s32.totalorder %s111, 0
      %s114 = sadd.s32 %s113, 1
      %s115 = scalar_select %p112, %s113, %s114
      %p118 = pneg %p112
      %p119 = scmp.eq.s32.totalorder %s16, 7
      %p120 = por %p118, %p119
      %p121 = scmp.ne.s32.totalorder %s113, %s116
      %p122 = scmp.eq.s32.totalorder %s16, 0
      %p123 = por %p121, %p122
      %p124 = scmp.ne.s32.totalorder %s113, %s116
      %p125 = scmp.eq.s32.totalorder %s21, 7
      %p126 = por %p124, %p125
      %p127 = scmp.ne.s32.totalorder %s116, %s117
      %p128 = scmp.eq.s32.totalorder %s21, 0
      %p129 = por %p127, %p128
      %p130 = scmp.ne.s32.totalorder %s116, %s117
      %p131 = scmp.eq.s32.totalorder %s22, 7
      %p132 = por %p130, %p131
      %p134 = scmp.ne.s32.totalorder %s117, %s133
      %p135 = scmp.eq.s32.totalorder %s22, 0
      %p136 = por %p134, %p135
      %s137 = ssub.s32 %s23, %s35
      %s138 = ssub.s32 %s24, %s31
      %s139 = sor.u32 %s137, %s138
      %p140 = scmp.eq.s32.totalorder %s139, 0
      %s142 = sadd.s32 %s141, 1
      %s143 = scalar_select %p140, %s141, %s142
      %p146 = pneg %p140
      %p147 = scmp.eq.s32.totalorder %s16, 7
      %p148 = por %p146, %p147
      %p149 = scmp.ne.s32.totalorder %s141, %s144
      %p150 = scmp.eq.s32.totalorder %s16, 0
      %p151 = por %p149, %p150
      %p152 = scmp.ne.s32.totalorder %s141, %s144
      %p153 = scmp.eq.s32.totalorder %s21, 7
      %p154 = por %p152, %p153
      %p155 = scmp.ne.s32.totalorder %s144, %s145
      %p156 = scmp.eq.s32.totalorder %s21, 0
      %p157 = por %p155, %p156
      %p158 = scmp.ne.s32.totalorder %s144, %s145
      %p159 = scmp.eq.s32.totalorder %s22, 7
      %p160 = por %p158, %p159
      %p162 = scmp.ne.s32.totalorder %s145, %s161
      %p163 = scmp.eq.s32.totalorder %s22, 0
      %p164 = por %p162, %p163
      %s165 = ssub.s32 %s23, %s35
      %s166 = ssub.s32 %s24, %s31
      %s167 = sor.u32 %s165, %s166
      %p168 = scmp.eq.s32.totalorder %s167, 0
      %s170 = sadd.s32 %s169, 1
      %s171 = scalar_select %p168, %s169, %s170
      %p174 = pneg %p168
      %p175 = scmp.eq.s32.totalorder %s16, 7
      %p176 = por %p174, %p175
      %p177 = scmp.ne.s32.totalorder %s169, %s172
      %p178 = scmp.eq.s32.totalorder %s16, 0
      %p179 = por %p177, %p178
      %p180 = scmp.ne.s32.totalorder %s169, %s172
      %p181 = scmp.eq.s32.totalorder %s21, 7
      %p182 = por %p180, %p181
      %p183 = scmp.ne.s32.totalorder %s172, %s173
      %p184 = scmp.eq.s32.totalorder %s21, 0
      %p185 = por %p183, %p184
      %p186 = scmp.ne.s32.totalorder %s172, %s173
      %p187 = scmp.eq.s32.totalorder %s22, 7
      %p188 = por %p186, %p187
      %p190 = scmp.ne.s32.totalorder %s173, %s189
      %p191 = scmp.eq.s32.totalorder %s22, 0
      %p192 = por %p190, %p191
      %p193 = scmp.le.s32.totalorder 1, %s16
      %p194 = scmp.lt.s32.totalorder %s16, 9
      %p195 = pnand %p193, %p194
      %p196 = pneg %p195
      // Predicated region
      $region9: #{tpu_custom_call.1} parent=5 // pred_check
        _
      $region10: #{tpu_custom_call.1} parent=5 // pred_check_branch
        %198 = sbr.rel (%p195) target = $region12
      $region11: #{tpu_custom_call.1} parent=5 // pred_region
        %s199 = ssub.s32 %s16, 1
        // Predicated region
        $region13: #{tpu_custom_call.1} parent=11 // pred_check
          %p200 = pneg %p77
        $region14: #{tpu_custom_call.1} parent=11 // pred_check_branch
          %202 = sbr.rel (%p200) target = $region16
        $region15: #{tpu_custom_call.1} parent=11 // pred_region
          %s204 = ssub.s32 8192, 8192
          %205 = vsyncadd [#allocation5], %s204
          %s206 = sshll.u32 [#allocation4], 4
          %s207 = int_to_ptr.vmem [resolvable:$true] %s206
          %212 = dma.hbm_to_vmem [thread:$0]  %s1, 8192, %s207, [#allocation5], 256, 256, 16
        $region16: #{tpu_custom_call.1} parent=11 // pred_fallthru
          _
      $region12: #{tpu_custom_call.1} parent=5 // pred_fallthru
        _
      %p213 = scmp.lt.s32.totalorder %s16, 8
      // Predicated region
      $region17: #{tpu_custom_call.1} parent=5 // pred_check
        %p214 = pneg %p213
      $region18: #{tpu_custom_call.1} parent=5 // pred_check_branch
        %216 = sbr.rel (%p214) target = $region20
      $region19: #{tpu_custom_call.1} parent=5 // pred_region
        // Predicated region
        $region21: #{tpu_custom_call.1} parent=19 // pred_check
          %p217 = pneg %p50
        $region22: #{tpu_custom_call.1} parent=19 // pred_check_branch
          %219 = sbr.rel (%p217) target = $region24
        $region23: #{tpu_custom_call.1} parent=19 // pred_region
          %s220 = sand.u32 %s40, 1
          %s221 = scalar_lea.sflag [#allocation3], %s220
          %s222 = sand.u32 %s40, 1
          %s223 = smul.addr %s222, 16
          %s224 = scalar_lea.vmem [#allocation2], %s223
          %s226 = ssub.s32 256, 256
          %227 = vsyncadd %s221, %s226
          %s228 = smul.addr %s24, 2
          %s229 = smul.addr %s23, 8
          %s230 = sadd.s32 %s228, %s229
          %s231 = smul.addr %s230, 128
          %s232 = scalar_lea.hbm %s0, %s231
          %s234 = sshll.u32 %s224, 4
          %s235 = int_to_ptr.vmem [resolvable:$true] %s234
          %237 = dma.hbm_to_vmem [thread:$0]  %s232, 256, %s235, %s221
        $region24: #{tpu_custom_call.1} parent=19 // pred_fallthru
          _
        // Predicated region
        $region25: #{tpu_custom_call.1} parent=19 // pred_check
          %p238 = pneg %p97
        $region26: #{tpu_custom_call.1} parent=19 // pred_check_branch
          %240 = sbr.rel (%p238) target = $region28
        $region27: #{tpu_custom_call.1} parent=19 // pred_region
          %p241 = scmp.lt.s32.totalorder %s24, 3
          %s242 = scalar_select %p241, %s24, 3
          %s243 = smul.addr %s242, 8
          %s244 = scalar_lea.vmem %s2, %s243
        $region28: #{tpu_custom_call.1} parent=19 // pred_fallthru
          _
        // Predicated region
        $region29: #{tpu_custom_call.1} parent=19 // pred_check
          %p245 = pneg %p123
        $region30: #{tpu_custom_call.1} parent=19 // pred_check_branch
          %247 = sbr.rel (%p245) target = $region32
        $region31: #{tpu_custom_call.1} parent=19 // pred_region
          %p248 = scmp.lt.s32.totalorder %s24, 3
          %s249 = scalar_select %p248, %s24, 3
          %s250 = smul.addr %s249, 8
          %s251 = scalar_lea.vmem %s3, %s250
        $region32: #{tpu_custom_call.1} parent=19 // pred_fallthru
          _
      $region20: #{tpu_custom_call.1} parent=5 // pred_fallthru
        _
      %p252 = scmp.le.s32.totalorder 1, %s16
      %p253 = scmp.lt.s32.totalorder %s16, 9
      %p254 = pnand %p252, %p253
      %p255 = pneg %p254
      // Predicated region
      $region33: #{tpu_custom_call.1} parent=5 // pred_check
        _
      $region34: #{tpu_custom_call.1} parent=5 // pred_check_branch
        %257 = sbr.rel (%p254) target = $region36
      $region35: #{tpu_custom_call.1} parent=5 // pred_region
        %s258 = ssub.s32 %s16, 1
        %s259 = sand.u32 %s43, 1
        %s260 = scalar_lea.sflag [#allocation3], %s259
        %s261 = sand.u32 %s43, 1
        %s262 = smul.addr %s261, 16
        %s263 = scalar_lea.vmem [#allocation2], %s262
        // Predicated region
        $region37: #{tpu_custom_call.1} parent=35 // pred_check
          %p264 = pneg %p56
        $region38: #{tpu_custom_call.1} parent=35 // pred_check_branch
          %266 = sbr.rel (%p264) target = $region40
        $region39: #{tpu_custom_call.1} parent=35 // pred_region
          %267 = dma.done %s260, 256
        $region40: #{tpu_custom_call.1} parent=35 // pred_fallthru
          _
        // Predicated region
        $region41: #{tpu_custom_call.1} parent=35 // pred_check
          %p268 = pneg %p77
        $region42: #{tpu_custom_call.1} parent=35 // pred_check_branch
          %270 = sbr.rel (%p268) target = $region44
        $region43: #{tpu_custom_call.1} parent=35 // pred_region
          %271 = dma.done [#allocation5], 8192
        $region44: #{tpu_custom_call.1} parent=35 // pred_fallthru
          _
        %s272 = sand.u32 %s43, 1
        %s273 = scalar_lea.sflag [#allocation3], %s272
        %s274 = sand.u32 %s43, 1
        %s275 = smul.addr %s274, 16
        %s276 = scalar_lea.vmem [#allocation2], %s275
        %p277 = pneg %p56
        %p278 = pneg %p53
        %p279 = pneg %p77
        %p280 = pneg %p74
        %p281 = scmp.lt.s32.totalorder %s26, 3
        %s282 = scalar_select %p281, %s26, 3
        %s283 = smul.addr %s282, 8
        %s284 = scalar_lea.vmem %s2, %s283
        %p285 = pneg %p103
        %p286 = pneg %p100
        %p287 = scmp.lt.s32.totalorder %s26, 3
        %s288 = scalar_select %p287, %s26, 3
        %s289 = smul.addr %s288, 8
        %s290 = scalar_lea.vmem %s3, %s289
        %p291 = pneg %p129
        %p292 = pneg %p126
        %p293 = pneg %p157
        %p294 = pneg %p154
        %p295 = scmp.lt.s32.totalorder %s25, 1
        %s296 = scalar_select %p295, %s25, 1
        %p297 = scmp.lt.s32.totalorder %s26, 3
        %s298 = scalar_select %p297, %s26, 3
        %s299 = smul.addr %s296, 4
        %s300 = sadd.s32 %s298, %s299
        %s301 = scalar_lea.vmem %s4, %s300
        %p302 = pneg %p185
        %p303 = pneg %p182
        %p304 = scmp.lt.s32.totalorder %s25, 1
        %s305 = scalar_select %p304, %s25, 1
        %p306 = scmp.lt.s32.totalorder %s26, 3
        %s307 = scalar_select %p306, %s26, 3
        %s308 = smul.addr %s305, 4
        %s309 = sadd.s32 %s307, %s308
        %s310 = scalar_lea.vmem %s5, %s309
        %p311 = scmp.lt.s32.totalorder %s26, 3
        %s312 = scalar_select %p311, %s26, 3
        %s313 = smul.addr %s312, 8
        %s314 = scalar_lea.vmem %s2, %s313
        %p315 = scmp.lt.s32.totalorder %s26, 3
        %s316 = scalar_select %p315, %s26, 3
        %s317 = smul.addr %s316, 8
        %s318 = scalar_lea.vmem %s3, %s317
        %p319 = scmp.lt.s32.totalorder %s25, 1
        %s320 = scalar_select %p319, %s25, 1
        %p321 = scmp.lt.s32.totalorder %s26, 3
        %s322 = scalar_select %p321, %s26, 3
        %s323 = smul.addr %s320, 4
        %s324 = sadd.s32 %s322, %s323
        %s325 = scalar_lea.vmem %s4, %s324
        %p326 = scmp.lt.s32.totalorder %s25, 1
        %s327 = scalar_select %p326, %s25, 1
        %p328 = scmp.lt.s32.totalorder %s26, 3
        %s329 = scalar_select %p328, %s26, 3
        %s330 = smul.addr %s327, 4
        %s331 = sadd.s32 %s329, %s330
        %s332 = scalar_lea.vmem %s5, %s331
        %v333 = vld [vmem:[%s263] sm:$0xff]
        %v334 = vld [vmem:[%s263 + $0x8] sm:$0xff]
        %v335 = vld [vmem:[#allocation4] sm:$0xff]
        %v336 = vld [vmem:[#allocation4 + $0x8] sm:$0xff]
        %v337 = vld [vmem:[#allocation4 + $0x10] sm:$0xff]
        %v338 = vld [vmem:[#allocation4 + $0x18] sm:$0xff]
        %v339 = vld [vmem:[#allocation4 + $0x20] sm:$0xff]
        %v340 = vld [vmem:[#allocation4 + $0x28] sm:$0xff]
        %v341 = vld [vmem:[#allocation4 + $0x30] sm:$0xff]
        %v342 = vld [vmem:[#allocation4 + $0x38] sm:$0xff]
        %v343 = vld [vmem:[#allocation4 + $0x40] sm:$0xff]
        %v344 = vld [vmem:[#allocation4 + $0x48] sm:$0xff]
        %v345 = vld [vmem:[#allocation4 + $0x50] sm:$0xff]
        %v346 = vld [vmem:[#allocation4 + $0x58] sm:$0xff]
        %v347 = vld [vmem:[#allocation4 + $0x60] sm:$0xff]
        %v348 = vld [vmem:[#allocation4 + $0x68] sm:$0xff]
        %v349 = vld [vmem:[#allocation4 + $0x70] sm:$0xff]
        %v350 = vld [vmem:[#allocation4 + $0x78] sm:$0xff]
        %v351 = vld [vmem:[#allocation4 + $0x80] sm:$0xff]
        %v352 = vld [vmem:[#allocation4 + $0x88] sm:$0xff]
        %v353 = vld [vmem:[#allocation4 + $0x90] sm:$0xff]
        %v354 = vld [vmem:[#allocation4 + $0x98] sm:$0xff]
        %v355 = vld [vmem:[#allocation4 + $0xa0] sm:$0xff]
        %v356 = vld [vmem:[#allocation4 + $0xa8] sm:$0xff]
        %v357 = vld [vmem:[#allocation4 + $0xb0] sm:$0xff]
        %v358 = vld [vmem:[#allocation4 + $0xb8] sm:$0xff]
        %v359 = vld [vmem:[#allocation4 + $0xc0] sm:$0xff]
        %v360 = vld [vmem:[#allocation4 + $0xc8] sm:$0xff]
        %v361 = vld [vmem:[#allocation4 + $0xd0] sm:$0xff]
        %v362 = vld [vmem:[#allocation4 + $0xd8] sm:$0xff]
        %v363 = vld [vmem:[#allocation4 + $0xe0] sm:$0xff]
        %v364 = vld [vmem:[#allocation4 + $0xe8] sm:$0xff]
        %v365 = vld [vmem:[#allocation4 + $0xf0] sm:$0xff]
        %v366 = vld [vmem:[#allocation4 + $0xf8] sm:$0xff]
        %v367 = vld [vmem:[#allocation4 + $0x100] sm:$0xff]
        %v368 = vld [vmem:[#allocation4 + $0x108] sm:$0xff]
        %v369 = vld [vmem:[#allocation4 + $0x110] sm:$0xff]
        %v370 = vld [vmem:[#allocation4 + $0x118] sm:$0xff]
        %v371 = vld [vmem:[#allocation4 + $0x120] sm:$0xff]
        %v372 = vld [vmem:[#allocation4 + $0x128] sm:$0xff]
        %v373 = vld [vmem:[#allocation4 + $0x130] sm:$0xff]
        %v374 = vld [vmem:[#allocation4 + $0x138] sm:$0xff]
        %v375 = vld [vmem:[#allocation4 + $0x140] sm:$0xff]
        %v376 = vld [vmem:[#allocation4 + $0x148] sm:$0xff]
        %v377 = vld [vmem:[#allocation4 + $0x150] sm:$0xff]
        %v378 = vld [vmem:[#allocation4 + $0x158] sm:$0xff]
        %v379 = vld [vmem:[#allocation4 + $0x160] sm:$0xff]
        %v380 = vld [vmem:[#allocation4 + $0x168] sm:$0xff]
        %v381 = vld [vmem:[#allocation4 + $0x170] sm:$0xff]
        %v382 = vld [vmem:[#allocation4 + $0x178] sm:$0xff]
        %v383 = vld [vmem:[#allocation4 + $0x180] sm:$0xff]
        %v384 = vld [vmem:[#allocation4 + $0x188] sm:$0xff]
        %v385 = vld [vmem:[#allocation4 + $0x190] sm:$0xff]
        %v386 = vld [vmem:[#allocation4 + $0x198] sm:$0xff]
        %v387 = vld [vmem:[#allocation4 + $0x1a0] sm:$0xff]
        %v388 = vld [vmem:[#allocation4 + $0x1a8] sm:$0xff]
        %v389 = vld [vmem:[#allocation4 + $0x1b0] sm:$0xff]
        %v390 = vld [vmem:[#allocation4 + $0x1b8] sm:$0xff]
        %v391 = vld [vmem:[#allocation4 + $0x1c0] sm:$0xff]
        %v392 = vld [vmem:[#allocation4 + $0x1c8] sm:$0xff]
        %v393 = vld [vmem:[#allocation4 + $0x1d0] sm:$0xff]
        %v394 = vld [vmem:[#allocation4 + $0x1d8] sm:$0xff]
        %v395 = vld [vmem:[#allocation4 + $0x1e0] sm:$0xff]
        %v396 = vld [vmem:[#allocation4 + $0x1e8] sm:$0xff]
        %v397 = vld [vmem:[#allocation4 + $0x1f0] sm:$0xff]
        %v398 = vld [vmem:[#allocation4 + $0x1f8] sm:$0xff]
        %v399 = vand.u32 %v366, 4294901760
        %400 = vmatprep.subr.mxu0 %v399
        %v401 = vand.u32 %v365, 4294901760
        %402 = vmatpush1.msra.mxu0 %v401
        %v403 = vand.u32 %v364, 4294901760
        %404 = vmatprep.subr.mxu0 %v403
        %v405 = vand.u32 %v363, 4294901760
        %406 = vmatpush1.msra.mxu0 %v405
        %v407 = vand.u32 %v362, 4294901760
        %408 = vmatprep.subr.mxu0 %v407
        %v409 = vand.u32 %v361, 4294901760
        %410 = vmatpush1.msra.mxu0 %v409
        %v411 = vand.u32 %v360, 4294901760
        %412 = vmatprep.subr.mxu0 %v411
        %v413 = vand.u32 %v359, 4294901760
        %414 = vmatpush1.msra.mxu0 %v413
        %v415 = vand.u32 %v358, 4294901760
        %416 = vmatprep.subr.mxu0 %v415
        %v417 = vand.u32 %v357, 4294901760
        %418 = vmatpush1.msra.mxu0 %v417
        %v419 = vand.u32 %v356, 4294901760
        %420 = vmatprep.subr.mxu0 %v419
        %v421 = vand.u32 %v355, 4294901760
        %422 = vmatpush1.msra.mxu0 %v421
        %v423 = vand.u32 %v354, 4294901760
        %424 = vmatprep.subr.mxu0 %v423
        %v425 = vand.u32 %v353, 4294901760
        %426 = vmatpush1.msra.mxu0 %v425
        %v427 = vand.u32 %v352, 4294901760
        %428 = vmatprep.subr.mxu0 %v427
        %v429 = vand.u32 %v351, 4294901760
        %430 = vmatpush1.msra.mxu0 %v429
        %v431 = vand.u32 %v350, 4294901760
        %432 = vmatprep.subr.mxu0 %v431
        %v433 = vand.u32 %v349, 4294901760
        %434 = vmatpush1.msra.mxu0 %v433
        %v435 = vand.u32 %v348, 4294901760
        %436 = vmatprep.subr.mxu0 %v435
        %v437 = vand.u32 %v347, 4294901760
        %438 = vmatpush1.msra.mxu0 %v437
        %v439 = vand.u32 %v346, 4294901760
        %440 = vmatprep.subr.mxu0 %v439
        %v441 = vand.u32 %v345, 4294901760
        %442 = vmatpush1.msra.mxu0 %v441
        %v443 = vand.u32 %v344, 4294901760
        %444 = vmatprep.subr.mxu0 %v443
        %v445 = vand.u32 %v343, 4294901760
        %446 = vmatpush1.msra.mxu0 %v445
        %v447 = vand.u32 %v342, 4294901760
        %448 = vmatprep.subr.mxu0 %v447
        %v449 = vand.u32 %v341, 4294901760
        %450 = vmatpush1.msra.mxu0 %v449
        %v451 = vand.u32 %v340, 4294901760
        %452 = vmatprep.subr.mxu0 %v451
        %v453 = vand.u32 %v339, 4294901760
        %454 = vmatpush1.msra.mxu0 %v453
        %v455 = vand.u32 %v338, 4294901760
        %456 = vmatprep.subr.mxu0 %v455
        %v457 = vand.u32 %v337, 4294901760
        %458 = vmatpush1.msra.mxu0 %v457
        %v459 = vand.u32 %v336, 4294901760
        %460 = vmatprep.subr.mxu0 %v459
        %v461 = vand.u32 %v335, 4294901760
        %462 = vmatpush1.msra.mxu0 %v461
        %v463 = vand.u32 %v398, 4294901760
        %464 = vmatprep.subr.mxu0 %v463
        %v465 = vand.u32 %v397, 4294901760
        %466 = vmatpush2.msra.mxu0 %v465
        %v467 = vand.u32 %v396, 4294901760
        %468 = vmatprep.subr.mxu0 %v467
        %v469 = vand.u32 %v395, 4294901760
        %470 = vmatpush2.msra.mxu0 %v469
        %v471 = vand.u32 %v394, 4294901760
        %472 = vmatprep.subr.mxu0 %v471
        %v473 = vand.u32 %v393, 4294901760
        %474 = vmatpush2.msra.mxu0 %v473
        %v475 = vand.u32 %v392, 4294901760
        %476 = vmatprep.subr.mxu0 %v475
        %v477 = vand.u32 %v391, 4294901760
        %478 = vmatpush2.msra.mxu0 %v477
        %v479 = vand.u32 %v390, 4294901760
        %480 = vmatprep.subr.mxu0 %v479
        %v481 = vand.u32 %v389, 4294901760
        %482 = vmatpush2.msra.mxu0 %v481
        %v483 = vand.u32 %v388, 4294901760
        %484 = vmatprep.subr.mxu0 %v483
        %v485 = vand.u32 %v387, 4294901760
        %486 = vmatpush2.msra.mxu0 %v485
        %v487 = vand.u32 %v386, 4294901760
        %488 = vmatprep.subr.mxu0 %v487
        %v489 = vand.u32 %v385, 4294901760
        %490 = vmatpush2.msra.mxu0 %v489
        %v491 = vand.u32 %v384, 4294901760
        %492 = vmatprep.subr.mxu0 %v491
        %v493 = vand.u32 %v383, 4294901760
        %494 = vmatpush2.msra.mxu0 %v493
        %v495 = vand.u32 %v382, 4294901760
        %496 = vmatprep.subr.mxu0 %v495
        %v497 = vand.u32 %v381, 4294901760
        %498 = vmatpush2.msra.mxu0 %v497
        %v499 = vand.u32 %v380, 4294901760
        %500 = vmatprep.subr.mxu0 %v499
        %v501 = vand.u32 %v379, 4294901760
        %502 = vmatpush2.msra.mxu0 %v501
        %v503 = vand.u32 %v378, 4294901760
        %504 = vmatprep.subr.mxu0 %v503
        %v505 = vand.u32 %v377, 4294901760
        %506 = vmatpush2.msra.mxu0 %v505
        %v507 = vand.u32 %v376, 4294901760
        %508 = vmatprep.subr.mxu0 %v507
        %v509 = vand.u32 %v375, 4294901760
        %510 = vmatpush2.msra.mxu0 %v509
        %v511 = vand.u32 %v374, 4294901760
        %512 = vmatprep.subr.mxu0 %v511
        %v513 = vand.u32 %v373, 4294901760
        %514 = vmatpush2.msra.mxu0 %v513
        %v515 = vand.u32 %v372, 4294901760
        %516 = vmatprep.subr.mxu0 %v515
        %v517 = vand.u32 %v371, 4294901760
        %518 = vmatpush2.msra.mxu0 %v517
        %v519 = vand.u32 %v370, 4294901760
        %520 = vmatprep.subr.mxu0 %v519
        %v521 = vand.u32 %v369, 4294901760
        %522 = vmatpush2.msra.mxu0 %v521
        %v523 = vand.u32 %v368, 4294901760
        %524 = vmatprep.subr.mxu0 %v523
        %v525 = vand.u32 %v367, 4294901760
        %526 = vmatpush2.msra.mxu0 %v525
        %v527 = vand.u32 %v334, 4294901760
        %v528 = vsub.f32 %v334, %v527
        %v529 = vand.u32 %v528, 4294901760
        %v530 = vsub.f32 %v528, %v529
        %v531 = vand.u32 %v530, 4294901760
        %532 = vmatprep.mubr.f32.mxu0 %v531
        %v533 = vand.u32 %v333, 4294901760
        %v534 = vsub.f32 %v333, %v533
        %v535 = vand.u32 %v534, 4294901760
        %v536 = vsub.f32 %v534, %v535
        %v537 = vand.u32 %v536, 4294901760
        %538 = vmatmul.mubr.f32.gmra.mxu0 %v537
        %v539 = vpop.f32.mrf.mxu0
        %v540 = vadd.f32 0.0, %v539
        %v541 = vpop.f32.mrf.mxu0
        %v542 = vadd.f32 0.0, %v541
        %543 = vdwg.mxu0
        %v544 = vand.u32 %v366, 4294901760
        %v545 = vsub.f32 %v366, %v544
        %v546 = vand.u32 %v545, 4294901760
        %v547 = vsub.f32 %v545, %v546
        %v548 = vand.u32 %v547, 4294901760
        %549 = vmatprep.subr.mxu0 %v548
        %v550 = vand.u32 %v365, 4294901760
        %v551 = vsub.f32 %v365, %v550
        %v552 = vand.u32 %v551, 4294901760
        %v553 = vsub.f32 %v551, %v552
        %v554 = vand.u32 %v553, 4294901760
        %555 = vmatpush1.msra.mxu0 %v554
        %v556 = vand.u32 %v364, 4294901760
        %v557 = vsub.f32 %v364, %v556
        %v558 = vand.u32 %v557, 4294901760
        %v559 = vsub.f32 %v557, %v558
        %v560 = vand.u32 %v559, 4294901760
        %561 = vmatprep.subr.mxu0 %v560
        %v562 = vand.u32 %v363, 4294901760
        %v563 = vsub.f32 %v363, %v562
        %v564 = vand.u32 %v563, 4294901760
        %v565 = vsub.f32 %v563, %v564
        %v566 = vand.u32 %v565, 4294901760
        %567 = vmatpush1.msra.mxu0 %v566
        %v568 = vand.u32 %v362, 4294901760
        %v569 = vsub.f32 %v362, %v568
        %v570 = vand.u32 %v569, 4294901760
        %v571 = vsub.f32 %v569, %v570
        %v572 = vand.u32 %v571, 4294901760
        %573 = vmatprep.subr.mxu0 %v572
        %v574 = vand.u32 %v361, 4294901760
        %v575 = vsub.f32 %v361, %v574
        %v576 = vand.u32 %v575, 4294901760
        %v577 = vsub.f32 %v575, %v576
        %v578 = vand.u32 %v577, 4294901760
        %579 = vmatpush1.msra.mxu0 %v578
        %v580 = vand.u32 %v360, 4294901760
        %v581 = vsub.f32 %v360, %v580
        %v582 = vand.u32 %v581, 4294901760
        %v583 = vsub.f32 %v581, %v582
        %v584 = vand.u32 %v583, 4294901760
        %585 = vmatprep.subr.mxu0 %v584
        %v586 = vand.u32 %v359, 4294901760
        %v587 = vsub.f32 %v359, %v586
        %v588 = vand.u32 %v587, 4294901760
        %v589 = vsub.f32 %v587, %v588
        %v590 = vand.u32 %v589, 4294901760
        %591 = vmatpush1.msra.mxu0 %v590
        %v592 = vand.u32 %v358, 4294901760
        %v593 = vsub.f32 %v358, %v592
        %v594 = vand.u32 %v593, 4294901760
        %v595 = vsub.f32 %v593, %v594
        %v596 = vand.u32 %v595, 4294901760
        %597 = vmatprep.subr.mxu0 %v596
        %v598 = vand.u32 %v357, 4294901760
        %v599 = vsub.f32 %v357, %v598
        %v600 = vand.u32 %v599, 4294901760
        %v601 = vsub.f32 %v599, %v600
        %v602 = vand.u32 %v601, 4294901760
        %603 = vmatpush1.msra.mxu0 %v602
        %v604 = vand.u32 %v356, 4294901760
        %v605 = vsub.f32 %v356, %v604
        %v606 = vand.u32 %v605, 4294901760
        %v607 = vsub.f32 %v605, %v606
        %v608 = vand.u32 %v607, 4294901760
        %609 = vmatprep.subr.mxu0 %v608
        %v610 = vand.u32 %v355, 4294901760
        %v611 = vsub.f32 %v355, %v610
        %v612 = vand.u32 %v611, 4294901760
        %v613 = vsub.f32 %v611, %v612
        %v614 = vand.u32 %v613, 4294901760
        %615 = vmatpush1.msra.mxu0 %v614
        %v616 = vand.u32 %v354, 4294901760
        %v617 = vsub.f32 %v354, %v616
        %v618 = vand.u32 %v617, 4294901760
        %v619 = vsub.f32 %v617, %v618
        %v620 = vand.u32 %v619, 4294901760
        %621 = vmatprep.subr.mxu0 %v620
        %v622 = vand.u32 %v353, 4294901760
        %v623 = vsub.f32 %v353, %v622
        %v624 = vand.u32 %v623, 4294901760
        %v625 = vsub.f32 %v623, %v624
        %v626 = vand.u32 %v625, 4294901760
        %627 = vmatpush1.msra.mxu0 %v626
        %v628 = vand.u32 %v352, 4294901760
        %v629 = vsub.f32 %v352, %v628
        %v630 = vand.u32 %v629, 4294901760
        %v631 = vsub.f32 %v629, %v630
        %v632 = vand.u32 %v631, 4294901760
        %633 = vmatprep.subr.mxu0 %v632
        %v634 = vand.u32 %v351, 4294901760
        %v635 = vsub.f32 %v351, %v634
        %v636 = vand.u32 %v635, 4294901760
        %v637 = vsub.f32 %v635, %v636
        %v638 = vand.u32 %v637, 4294901760
        %639 = vmatpush1.msra.mxu0 %v638
        %v640 = vand.u32 %v350, 4294901760
        %v641 = vsub.f32 %v350, %v640
        %v642 = vand.u32 %v641, 4294901760
        %v643 = vsub.f32 %v641, %v642
        %v644 = vand.u32 %v643, 4294901760
        %645 = vmatprep.subr.mxu0 %v644
        %v646 = vand.u32 %v349, 4294901760
        %v647 = vsub.f32 %v349, %v646
        %v648 = vand.u32 %v647, 4294901760
        %v649 = vsub.f32 %v647, %v648
        %v650 = vand.u32 %v649, 4294901760
        %651 = vmatpush1.msra.mxu0 %v650
        %v652 = vand.u32 %v348, 4294901760
        %v653 = vsub.f32 %v348, %v652
        %v654 = vand.u32 %v653, 4294901760
        %v655 = vsub.f32 %v653, %v654
        %v656 = vand.u32 %v655, 4294901760
        %657 = vmatprep.subr.mxu0 %v656
        %v658 = vand.u32 %v347, 4294901760
        %v659 = vsub.f32 %v347, %v658
        %v660 = vand.u32 %v659, 4294901760
        %v661 = vsub.f32 %v659, %v660
        %v662 = vand.u32 %v661, 4294901760
        %663 = vmatpush1.msra.mxu0 %v662
        %v664 = vand.u32 %v346, 4294901760
        %v665 = vsub.f32 %v346, %v664
        %v666 = vand.u32 %v665, 4294901760
        %v667 = vsub.f32 %v665, %v666
        %v668 = vand.u32 %v667, 4294901760
        %669 = vmatprep.subr.mxu0 %v668
        %v670 = vand.u32 %v345, 4294901760
        %v671 = vsub.f32 %v345, %v670
        %v672 = vand.u32 %v671, 4294901760
        %v673 = vsub.f32 %v671, %v672
        %v674 = vand.u32 %v673, 4294901760
        %675 = vmatpush1.msra.mxu0 %v674
        %v676 = vand.u32 %v344, 4294901760
        %v677 = vsub.f32 %v344, %v676
        %v678 = vand.u32 %v677, 4294901760
        %v679 = vsub.f32 %v677, %v678
        %v680 = vand.u32 %v679, 4294901760
        %681 = vmatprep.subr.mxu0 %v680
        %v682 = vand.u32 %v343, 4294901760
        %v683 = vsub.f32 %v343, %v682
        %v684 = vand.u32 %v683, 4294901760
        %v685 = vsub.f32 %v683, %v684
        %v686 = vand.u32 %v685, 4294901760
        %687 = vmatpush1.msra.mxu0 %v686
        %v688 = vand.u32 %v342, 4294901760
        %v689 = vsub.f32 %v342, %v688
        %v690 = vand.u32 %v689, 4294901760
        %v691 = vsub.f32 %v689, %v690
        %v692 = vand.u32 %v691, 4294901760
        %693 = vmatprep.subr.mxu0 %v692
        %v694 = vand.u32 %v341, 4294901760
        %v695 = vsub.f32 %v341, %v694
        %v696 = vand.u32 %v695, 4294901760
        %v697 = vsub.f32 %v695, %v696
        %v698 = vand.u32 %v697, 4294901760
        %699 = vmatpush1.msra.mxu0 %v698
        %v700 = vand.u32 %v340, 4294901760
        %v701 = vsub.f32 %v340, %v700
        %v702 = vand.u32 %v701, 4294901760
        %v703 = vsub.f32 %v701, %v702
        %v704 = vand.u32 %v703, 4294901760
        %705 = vmatprep.subr.mxu0 %v704
        %v706 = vand.u32 %v339, 4294901760
        %v707 = vsub.f32 %v339, %v706
        %v708 = vand.u32 %v707, 4294901760
        %v709 = vsub.f32 %v707, %v708
        %v710 = vand.u32 %v709, 4294901760
        %711 = vmatpush1.msra.mxu0 %v710
        %v712 = vand.u32 %v338, 4294901760
        %v713 = vsub.f32 %v338, %v712
        %v714 = vand.u32 %v713, 4294901760
        %v715 = vsub.f32 %v713, %v714
        %v716 = vand.u32 %v715, 4294901760
        %717 = vmatprep.subr.mxu0 %v716
        %v718 = vand.u32 %v337, 4294901760
        %v719 = vsub.f32 %v337, %v718
        %v720 = vand.u32 %v719, 4294901760
        %v721 = vsub.f32 %v719, %v720
        %v722 = vand.u32 %v721, 4294901760
        %723 = vmatpush1.msra.mxu0 %v722
        %v724 = vand.u32 %v336, 4294901760
        %v725 = vsub.f32 %v336, %v724
        %v726 = vand.u32 %v725, 4294901760
        %v727 = vsub.f32 %v725, %v726
        %v728 = vand.u32 %v727, 4294901760
        %729 = vmatprep.subr.mxu0 %v728
        %v730 = vand.u32 %v335, 4294901760
        %v731 = vsub.f32 %v335, %v730
        %v732 = vand.u32 %v731, 4294901760
        %v733 = vsub.f32 %v731, %v732
        %v734 = vand.u32 %v733, 4294901760
        %735 = vmatpush1.msra.mxu0 %v734
        %v736 = vand.u32 %v398, 4294901760
        %v737 = vsub.f32 %v398, %v736
        %v738 = vand.u32 %v737, 4294901760
        %v739 = vsub.f32 %v737, %v738
        %v740 = vand.u32 %v739, 4294901760
        %741 = vmatprep.subr.mxu0 %v740
        %v742 = vand.u32 %v397, 4294901760
        %v743 = vsub.f32 %v397, %v742
        %v744 = vand.u32 %v743, 4294901760
        %v745 = vsub.f32 %v743, %v744
        %v746 = vand.u32 %v745, 4294901760
        %747 = vmatpush2.msra.mxu0 %v746
        %v748 = vand.u32 %v396, 4294901760
        %v749 = vsub.f32 %v396, %v748
        %v750 = vand.u32 %v749, 4294901760
        %v751 = vsub.f32 %v749, %v750
        %v752 = vand.u32 %v751, 4294901760
        %753 = vmatprep.subr.mxu0 %v752
        %v754 = vand.u32 %v395, 4294901760
        %v755 = vsub.f32 %v395, %v754
        %v756 = vand.u32 %v755, 4294901760
        %v757 = vsub.f32 %v755, %v756
        %v758 = vand.u32 %v757, 4294901760
        %759 = vmatpush2.msra.mxu0 %v758
        %v760 = vand.u32 %v394, 4294901760
        %v761 = vsub.f32 %v394, %v760
        %v762 = vand.u32 %v761, 4294901760
        %v763 = vsub.f32 %v761, %v762
        %v764 = vand.u32 %v763, 4294901760
        %765 = vmatprep.subr.mxu0 %v764
        %v766 = vand.u32 %v393, 4294901760
        %v767 = vsub.f32 %v393, %v766
        %v768 = vand.u32 %v767, 4294901760
        %v769 = vsub.f32 %v767, %v768
        %v770 = vand.u32 %v769, 4294901760
        %771 = vmatpush2.msra.mxu0 %v770
        %v772 = vand.u32 %v392, 4294901760
        %v773 = vsub.f32 %v392, %v772
        %v774 = vand.u32 %v773, 4294901760
        %v775 = vsub.f32 %v773, %v774
        %v776 = vand.u32 %v775, 4294901760
        %777 = vmatprep.subr.mxu0 %v776
        %v778 = vand.u32 %v391, 4294901760
        %v779 = vsub.f32 %v391, %v778
        %v780 = vand.u32 %v779, 4294901760
        %v781 = vsub.f32 %v779, %v780
        %v782 = vand.u32 %v781, 4294901760
        %783 = vmatpush2.msra.mxu0 %v782
        %v784 = vand.u32 %v390, 4294901760
        %v785 = vsub.f32 %v390, %v784
        %v786 = vand.u32 %v785, 4294901760
        %v787 = vsub.f32 %v785, %v786
        %v788 = vand.u32 %v787, 4294901760
        %789 = vmatprep.subr.mxu0 %v788
        %v790 = vand.u32 %v389, 4294901760
        %v791 = vsub.f32 %v389, %v790
        %v792 = vand.u32 %v791, 4294901760
        %v793 = vsub.f32 %v791, %v792
        %v794 = vand.u32 %v793, 4294901760
        %795 = vmatpush2.msra.mxu0 %v794
        %v796 = vand.u32 %v388, 4294901760
        %v797 = vsub.f32 %v388, %v796
        %v798 = vand.u32 %v797, 4294901760
        %v799 = vsub.f32 %v797, %v798
        %v800 = vand.u32 %v799, 4294901760
        %801 = vmatprep.subr.mxu0 %v800
        %v802 = vand.u32 %v387, 4294901760
        %v803 = vsub.f32 %v387, %v802
        %v804 = vand.u32 %v803, 4294901760
        %v805 = vsub.f32 %v803, %v804
        %v806 = vand.u32 %v805, 4294901760
        %807 = vmatpush2.msra.mxu0 %v806
        %v808 = vand.u32 %v386, 4294901760
        %v809 = vsub.f32 %v386, %v808
        %v810 = vand.u32 %v809, 4294901760
        %v811 = vsub.f32 %v809, %v810
        %v812 = vand.u32 %v811, 4294901760
        %813 = vmatprep.subr.mxu0 %v812
        %v814 = vand.u32 %v385, 4294901760
        %v815 = vsub.f32 %v385, %v814
        %v816 = vand.u32 %v815, 4294901760
        %v817 = vsub.f32 %v815, %v816
        %v818 = vand.u32 %v817, 4294901760
        %819 = vmatpush2.msra.mxu0 %v818
        %v820 = vand.u32 %v384, 4294901760
        %v821 = vsub.f32 %v384, %v820
        %v822 = vand.u32 %v821, 4294901760
        %v823 = vsub.f32 %v821, %v822
        %v824 = vand.u32 %v823, 4294901760
        %825 = vmatprep.subr.mxu0 %v824
        %v826 = vand.u32 %v383, 4294901760
        %v827 = vsub.f32 %v383, %v826
        %v828 = vand.u32 %v827, 4294901760
        %v829 = vsub.f32 %v827, %v828
        %v830 = vand.u32 %v829, 4294901760
        %831 = vmatpush2.msra.mxu0 %v830
        %v832 = vand.u32 %v382, 4294901760
        %v833 = vsub.f32 %v382, %v832
        %v834 = vand.u32 %v833, 4294901760
        %v835 = vsub.f32 %v833, %v834
        %v836 = vand.u32 %v835, 4294901760
        %837 = vmatprep.subr.mxu0 %v836
        %v838 = vand.u32 %v381, 4294901760
        %v839 = vsub.f32 %v381, %v838
        %v840 = vand.u32 %v839, 4294901760
        %v841 = vsub.f32 %v839, %v840
        %v842 = vand.u32 %v841, 4294901760
        %843 = vmatpush2.msra.mxu0 %v842
        %v844 = vand.u32 %v380, 4294901760
        %v845 = vsub.f32 %v380, %v844
        %v846 = vand.u32 %v845, 4294901760
        %v847 = vsub.f32 %v845, %v846
        %v848 = vand.u32 %v847, 4294901760
        %849 = vmatprep.subr.mxu0 %v848
        %v850 = vand.u32 %v379, 4294901760
        %v851 = vsub.f32 %v379, %v850
        %v852 = vand.u32 %v851, 4294901760
        %v853 = vsub.f32 %v851, %v852
        %v854 = vand.u32 %v853, 4294901760
        %855 = vmatpush2.msra.mxu0 %v854
        %v856 = vand.u32 %v378, 4294901760
        %v857 = vsub.f32 %v378, %v856
        %v858 = vand.u32 %v857, 4294901760
        %v859 = vsub.f32 %v857, %v858
        %v860 = vand.u32 %v859, 4294901760
        %861 = vmatprep.subr.mxu0 %v860
        %v862 = vand.u32 %v377, 4294901760
        %v863 = vsub.f32 %v377, %v862
        %v864 = vand.u32 %v863, 4294901760
        %v865 = vsub.f32 %v863, %v864
        %v866 = vand.u32 %v865, 4294901760
        %867 = vmatpush2.msra.mxu0 %v866
        %v868 = vand.u32 %v376, 4294901760
        %v869 = vsub.f32 %v376, %v868
        %v870 = vand.u32 %v869, 4294901760
        %v871 = vsub.f32 %v869, %v870
        %v872 = vand.u32 %v871, 4294901760
        %873 = vmatprep.subr.mxu0 %v872
        %v874 = vand.u32 %v375, 4294901760
        %v875 = vsub.f32 %v375, %v874
        %v876 = vand.u32 %v875, 4294901760
        %v877 = vsub.f32 %v875, %v876
        %v878 = vand.u32 %v877, 4294901760
        %879 = vmatpush2.msra.mxu0 %v878
        %v880 = vand.u32 %v374, 4294901760
        %v881 = vsub.f32 %v374, %v880
        %v882 = vand.u32 %v881, 4294901760
        %v883 = vsub.f32 %v881, %v882
        %v884 = vand.u32 %v883, 4294901760
        %885 = vmatprep.subr.mxu0 %v884
        %v886 = vand.u32 %v373, 4294901760
        %v887 = vsub.f32 %v373, %v886
        %v888 = vand.u32 %v887, 4294901760
        %v889 = vsub.f32 %v887, %v888
        %v890 = vand.u32 %v889, 4294901760
        %891 = vmatpush2.msra.mxu0 %v890
        %v892 = vand.u32 %v372, 4294901760
        %v893 = vsub.f32 %v372, %v892
        %v894 = vand.u32 %v893, 4294901760
        %v895 = vsub.f32 %v893, %v894
        %v896 = vand.u32 %v895, 4294901760
        %897 = vmatprep.subr.mxu0 %v896
        %v898 = vand.u32 %v371, 4294901760
        %v899 = vsub.f32 %v371, %v898
        %v900 = vand.u32 %v899, 4294901760
        %v901 = vsub.f32 %v899, %v900
        %v902 = vand.u32 %v901, 4294901760
        %903 = vmatpush2.msra.mxu0 %v902
        %v904 = vand.u32 %v370, 4294901760
        %v905 = vsub.f32 %v370, %v904
        %v906 = vand.u32 %v905, 4294901760
        %v907 = vsub.f32 %v905, %v906
        %v908 = vand.u32 %v907, 4294901760
        %909 = vmatprep.subr.mxu0 %v908
        %v910 = vand.u32 %v369, 4294901760
        %v911 = vsub.f32 %v369, %v910
        %v912 = vand.u32 %v911, 4294901760
        %v913 = vsub.f32 %v911, %v912
        %v914 = vand.u32 %v913, 4294901760
        %915 = vmatpush2.msra.mxu0 %v914
        %v916 = vand.u32 %v368, 4294901760
        %v917 = vsub.f32 %v368, %v916
        %v918 = vand.u32 %v917, 4294901760
        %v919 = vsub.f32 %v917, %v918
        %v920 = vand.u32 %v919, 4294901760
        %921 = vmatprep.subr.mxu0 %v920
        %v922 = vand.u32 %v367, 4294901760
        %v923 = vsub.f32 %v367, %v922
        %v924 = vand.u32 %v923, 4294901760
        %v925 = vsub.f32 %v923, %v924
        %v926 = vand.u32 %v925, 4294901760
        %927 = vmatpush2.msra.mxu0 %v926
        %v928 = vand.u32 %v334, 4294901760
        %929 = vmatprep.mubr.f32.mxu0 %v928
        %v930 = vand.u32 %v333, 4294901760
        %931 = vmatmul.mubr.f32.gmra.mxu0 %v930
        %v932 = vpop.f32.mrf.mxu0
        %v933 = vadd.f32 %v540, %v932
        %v934 = vpop.f32.mrf.mxu0
        %v935 = vadd.f32 %v542, %v934
        %936 = vdwg.mxu0
        %v937 = vand.u32 %v366, 4294901760
        %v938 = vsub.f32 %v366, %v937
        %939 = vmatprep.subr.mxu0 %v938
        %v940 = vand.u32 %v365, 4294901760
        %v941 = vsub.f32 %v365, %v940
        %942 = vmatpush1.msra.mxu0 %v941
        %v943 = vand.u32 %v364, 4294901760
        %v944 = vsub.f32 %v364, %v943
        %945 = vmatprep.subr.mxu0 %v944
        %v946 = vand.u32 %v363, 4294901760
        %v947 = vsub.f32 %v363, %v946
        %948 = vmatpush1.msra.mxu0 %v947
        %v949 = vand.u32 %v362, 4294901760
        %v950 = vsub.f32 %v362, %v949
        %951 = vmatprep.subr.mxu0 %v950
        %v952 = vand.u32 %v361, 4294901760
        %v953 = vsub.f32 %v361, %v952
        %954 = vmatpush1.msra.mxu0 %v953
        %v955 = vand.u32 %v360, 4294901760
        %v956 = vsub.f32 %v360, %v955
        %957 = vmatprep.subr.mxu0 %v956
        %v958 = vand.u32 %v359, 4294901760
        %v959 = vsub.f32 %v359, %v958
        %960 = vmatpush1.msra.mxu0 %v959
        %v961 = vand.u32 %v358, 4294901760
        %v962 = vsub.f32 %v358, %v961
        %963 = vmatprep.subr.mxu0 %v962
        %v964 = vand.u32 %v357, 4294901760
        %v965 = vsub.f32 %v357, %v964
        %966 = vmatpush1.msra.mxu0 %v965
        %v967 = vand.u32 %v356, 4294901760
        %v968 = vsub.f32 %v356, %v967
        %969 = vmatprep.subr.mxu0 %v968
        %v970 = vand.u32 %v355, 4294901760
        %v971 = vsub.f32 %v355, %v970
        %972 = vmatpush1.msra.mxu0 %v971
        %v973 = vand.u32 %v354, 4294901760
        %v974 = vsub.f32 %v354, %v973
        %975 = vmatprep.subr.mxu0 %v974
        %v976 = vand.u32 %v353, 4294901760
        %v977 = vsub.f32 %v353, %v976
        %978 = vmatpush1.msra.mxu0 %v977
        %v979 = vand.u32 %v352, 4294901760
        %v980 = vsub.f32 %v352, %v979
        %981 = vmatprep.subr.mxu0 %v980
        %v982 = vand.u32 %v351, 4294901760
        %v983 = vsub.f32 %v351, %v982
        %984 = vmatpush1.msra.mxu0 %v983
        %v985 = vand.u32 %v350, 4294901760
        %v986 = vsub.f32 %v350, %v985
        %987 = vmatprep.subr.mxu0 %v986
        %v988 = vand.u32 %v349, 4294901760
        %v989 = vsub.f32 %v349, %v988
        %990 = vmatpush1.msra.mxu0 %v989
        %v991 = vand.u32 %v348, 4294901760
        %v992 = vsub.f32 %v348, %v991
        %993 = vmatprep.subr.mxu0 %v992
        %v994 = vand.u32 %v347, 4294901760
        %v995 = vsub.f32 %v347, %v994
        %996 = vmatpush1.msra.mxu0 %v995
        %v997 = vand.u32 %v346, 4294901760
        %v998 = vsub.f32 %v346, %v997
        %999 = vmatprep.subr.mxu0 %v998
        %v1000 = vand.u32 %v345, 4294901760
        %v1001 = vsub.f32 %v345, %v1000
        %1002 = vmatpush1.msra.mxu0 %v1001
        %v1003 = vand.u32 %v344, 4294901760
        %v1004 = vsub.f32 %v344, %v1003
        %1005 = vmatprep.subr.mxu0 %v1004
        %v1006 = vand.u32 %v343, 4294901760
        %v1007 = vsub.f32 %v343, %v1006
        %1008 = vmatpush1.msra.mxu0 %v1007
        %v1009 = vand.u32 %v342, 4294901760
        %v1010 = vsub.f32 %v342, %v1009
        %1011 = vmatprep.subr.mxu0 %v1010
        %v1012 = vand.u32 %v341, 4294901760
        %v1013 = vsub.f32 %v341, %v1012
        %1014 = vmatpush1.msra.mxu0 %v1013
        %v1015 = vand.u32 %v340, 4294901760
        %v1016 = vsub.f32 %v340, %v1015
        %1017 = vmatprep.subr.mxu0 %v1016
        %v1018 = vand.u32 %v339, 4294901760
        %v1019 = vsub.f32 %v339, %v1018
        %1020 = vmatpush1.msra.mxu0 %v1019
        %v1021 = vand.u32 %v338, 4294901760
        %v1022 = vsub.f32 %v338, %v1021
        %1023 = vmatprep.subr.mxu0 %v1022
        %v1024 = vand.u32 %v337, 4294901760
        %v1025 = vsub.f32 %v337, %v1024
        %1026 = vmatpush1.msra.mxu0 %v1025
        %v1027 = vand.u32 %v336, 4294901760
        %v1028 = vsub.f32 %v336, %v1027
        %1029 = vmatprep.subr.mxu0 %v1028
        %v1030 = vand.u32 %v335, 4294901760
        %v1031 = vsub.f32 %v335, %v1030
        %1032 = vmatpush1.msra.mxu0 %v1031
        %v1033 = vand.u32 %v398, 4294901760
        %v1034 = vsub.f32 %v398, %v1033
        %1035 = vmatprep.subr.mxu0 %v1034
        %v1036 = vand.u32 %v397, 4294901760
        %v1037 = vsub.f32 %v397, %v1036
        %1038 = vmatpush2.msra.mxu0 %v1037
        %v1039 = vand.u32 %v396, 4294901760
        %v1040 = vsub.f32 %v396, %v1039
        %1041 = vmatprep.subr.mxu0 %v1040
        %v1042 = vand.u32 %v395, 4294901760
        %v1043 = vsub.f32 %v395, %v1042
        %1044 = vmatpush2.msra.mxu0 %v1043
        %v1045 = vand.u32 %v394, 4294901760
        %v1046 = vsub.f32 %v394, %v1045
        %1047 = vmatprep.subr.mxu0 %v1046
        %v1048 = vand.u32 %v393, 4294901760
        %v1049 = vsub.f32 %v393, %v1048
        %1050 = vmatpush2.msra.mxu0 %v1049
        %v1051 = vand.u32 %v392, 4294901760
        %v1052 = vsub.f32 %v392, %v1051
        %1053 = vmatprep.subr.mxu0 %v1052
        %v1054 = vand.u32 %v391, 4294901760
        %v1055 = vsub.f32 %v391, %v1054
        %1056 = vmatpush2.msra.mxu0 %v1055
        %v1057 = vand.u32 %v390, 4294901760
        %v1058 = vsub.f32 %v390, %v1057
        %1059 = vmatprep.subr.mxu0 %v1058
        %v1060 = vand.u32 %v389, 4294901760
        %v1061 = vsub.f32 %v389, %v1060
        %1062 = vmatpush2.msra.mxu0 %v1061
        %v1063 = vand.u32 %v388, 4294901760
        %v1064 = vsub.f32 %v388, %v1063
        %1065 = vmatprep.subr.mxu0 %v1064
        %v1066 = vand.u32 %v387, 4294901760
        %v1067 = vsub.f32 %v387, %v1066
        %1068 = vmatpush2.msra.mxu0 %v1067
        %v1069 = vand.u32 %v386, 4294901760
        %v1070 = vsub.f32 %v386, %v1069
        %1071 = vmatprep.subr.mxu0 %v1070
        %v1072 = vand.u32 %v385, 4294901760
        %v1073 = vsub.f32 %v385, %v1072
        %1074 = vmatpush2.msra.mxu0 %v1073
        %v1075 = vand.u32 %v384, 4294901760
        %v1076 = vsub.f32 %v384, %v1075
        %1077 = vmatprep.subr.mxu0 %v1076
        %v1078 = vand.u32 %v383, 4294901760
        %v1079 = vsub.f32 %v383, %v1078
        %1080 = vmatpush2.msra.mxu0 %v1079
        %v1081 = vand.u32 %v382, 4294901760
        %v1082 = vsub.f32 %v382, %v1081
        %1083 = vmatprep.subr.mxu0 %v1082
        %v1084 = vand.u32 %v381, 4294901760
        %v1085 = vsub.f32 %v381, %v1084
        %1086 = vmatpush2.msra.mxu0 %v1085
        %v1087 = vand.u32 %v380, 4294901760
        %v1088 = vsub.f32 %v380, %v1087
        %1089 = vmatprep.subr.mxu0 %v1088
        %v1090 = vand.u32 %v379, 4294901760
        %v1091 = vsub.f32 %v379, %v1090
        %1092 = vmatpush2.msra.mxu0 %v1091
        %v1093 = vand.u32 %v378, 4294901760
        %v1094 = vsub.f32 %v378, %v1093
        %1095 = vmatprep.subr.mxu0 %v1094
        %v1096 = vand.u32 %v377, 4294901760
        %v1097 = vsub.f32 %v377, %v1096
        %1098 = vmatpush2.msra.mxu0 %v1097
        %v1099 = vand.u32 %v376, 4294901760
        %v1100 = vsub.f32 %v376, %v1099
        %1101 = vmatprep.subr.mxu0 %v1100
        %v1102 = vand.u32 %v375, 4294901760
        %v1103 = vsub.f32 %v375, %v1102
        %1104 = vmatpush2.msra.mxu0 %v1103
        %v1105 = vand.u32 %v374, 4294901760
        %v1106 = vsub.f32 %v374, %v1105
        %1107 = vmatprep.subr.mxu0 %v1106
        %v1108 = vand.u32 %v373, 4294901760
        %v1109 = vsub.f32 %v373, %v1108
        %1110 = vmatpush2.msra.mxu0 %v1109
        %v1111 = vand.u32 %v372, 4294901760
        %v1112 = vsub.f32 %v372, %v1111
        %1113 = vmatprep.subr.mxu0 %v1112
        %v1114 = vand.u32 %v371, 4294901760
        %v1115 = vsub.f32 %v371, %v1114
        %1116 = vmatpush2.msra.mxu0 %v1115
        %v1117 = vand.u32 %v370, 4294901760
        %v1118 = vsub.f32 %v370, %v1117
        %1119 = vmatprep.subr.mxu0 %v1118
        %v1120 = vand.u32 %v369, 4294901760
        %v1121 = vsub.f32 %v369, %v1120
        %1122 = vmatpush2.msra.mxu0 %v1121
        %v1123 = vand.u32 %v368, 4294901760
        %v1124 = vsub.f32 %v368, %v1123
        %1125 = vmatprep.subr.mxu0 %v1124
        %v1126 = vand.u32 %v367, 4294901760
        %v1127 = vsub.f32 %v367, %v1126
        %1128 = vmatpush2.msra.mxu0 %v1127
        %v1129 = vand.u32 %v334, 4294901760
        %v1130 = vsub.f32 %v334, %v1129
        %1131 = vmatprep.mubr.f32.mxu0 %v1130
        %v1132 = vand.u32 %v333, 4294901760
        %v1133 = vsub.f32 %v333, %v1132
        %1134 = vmatmul.mubr.f32.gmra.mxu0 %v1133
        %v1135 = vpop.f32.mrf.mxu0
        %v1136 = vadd.f32 %v933, %v1135
        %v1137 = vpop.f32.mrf.mxu0
        %v1138 = vadd.f32 %v935, %v1137
        %1139 = vdwg.mxu0
        %v1140 = vand.u32 %v366, 4294901760
        %1141 = vmatprep.subr.mxu0 %v1140
        %v1142 = vand.u32 %v365, 4294901760
        %1143 = vmatpush1.msra.mxu0 %v1142
        %v1144 = vand.u32 %v364, 4294901760
        %1145 = vmatprep.subr.mxu0 %v1144
        %v1146 = vand.u32 %v363, 4294901760
        %1147 = vmatpush1.msra.mxu0 %v1146
        %v1148 = vand.u32 %v362, 4294901760
        %1149 = vmatprep.subr.mxu0 %v1148
        %v1150 = vand.u32 %v361, 4294901760
        %1151 = vmatpush1.msra.mxu0 %v1150
        %v1152 = vand.u32 %v360, 4294901760
        %1153 = vmatprep.subr.mxu0 %v1152
        %v1154 = vand.u32 %v359, 4294901760
        %1155 = vmatpush1.msra.mxu0 %v1154
        %v1156 = vand.u32 %v358, 4294901760
        %1157 = vmatprep.subr.mxu0 %v1156
        %v1158 = vand.u32 %v357, 4294901760
        %1159 = vmatpush1.msra.mxu0 %v1158
        %v1160 = vand.u32 %v356, 4294901760
        %1161 = vmatprep.subr.mxu0 %v1160
        %v1162 = vand.u32 %v355, 4294901760
        %1163 = vmatpush1.msra.mxu0 %v1162
        %v1164 = vand.u32 %v354, 4294901760
        %1165 = vmatprep.subr.mxu0 %v1164
        %v1166 = vand.u32 %v353, 4294901760
        %1167 = vmatpush1.msra.mxu0 %v1166
        %v1168 = vand.u32 %v352, 4294901760
        %1169 = vmatprep.subr.mxu0 %v1168
        %v1170 = vand.u32 %v351, 4294901760
        %1171 = vmatpush1.msra.mxu0 %v1170
        %v1172 = vand.u32 %v350, 4294901760
        %1173 = vmatprep.subr.mxu0 %v1172
        %v1174 = vand.u32 %v349, 4294901760
        %1175 = vmatpush1.msra.mxu0 %v1174
        %v1176 = vand.u32 %v348, 4294901760
        %1177 = vmatprep.subr.mxu0 %v1176
        %v1178 = vand.u32 %v347, 4294901760
        %1179 = vmatpush1.msra.mxu0 %v1178
        %v1180 = vand.u32 %v346, 4294901760
        %1181 = vmatprep.subr.mxu0 %v1180
        %v1182 = vand.u32 %v345, 4294901760
        %1183 = vmatpush1.msra.mxu0 %v1182
        %v1184 = vand.u32 %v344, 4294901760
        %1185 = vmatprep.subr.mxu0 %v1184
        %v1186 = vand.u32 %v343, 4294901760
        %1187 = vmatpush1.msra.mxu0 %v1186
        %v1188 = vand.u32 %v342, 4294901760
        %1189 = vmatprep.subr.mxu0 %v1188
        %v1190 = vand.u32 %v341, 4294901760
        %1191 = vmatpush1.msra.mxu0 %v1190
        %v1192 = vand.u32 %v340, 4294901760
        %1193 = vmatprep.subr.mxu0 %v1192
        %v1194 = vand.u32 %v339, 4294901760
        %1195 = vmatpush1.msra.mxu0 %v1194
        %v1196 = vand.u32 %v338, 4294901760
        %1197 = vmatprep.subr.mxu0 %v1196
        %v1198 = vand.u32 %v337, 4294901760
        %1199 = vmatpush1.msra.mxu0 %v1198
        %v1200 = vand.u32 %v336, 4294901760
        %1201 = vmatprep.subr.mxu0 %v1200
        %v1202 = vand.u32 %v335, 4294901760
        %1203 = vmatpush1.msra.mxu0 %v1202
        %v1204 = vand.u32 %v398, 4294901760
        %1205 = vmatprep.subr.mxu0 %v1204
        %v1206 = vand.u32 %v397, 4294901760
        %1207 = vmatpush2.msra.mxu0 %v1206
        %v1208 = vand.u32 %v396, 4294901760
        %1209 = vmatprep.subr.mxu0 %v1208
        %v1210 = vand.u32 %v395, 4294901760
        %1211 = vmatpush2.msra.mxu0 %v1210
        %v1212 = vand.u32 %v394, 4294901760
        %1213 = vmatprep.subr.mxu0 %v1212
        %v1214 = vand.u32 %v393, 4294901760
        %1215 = vmatpush2.msra.mxu0 %v1214
        %v1216 = vand.u32 %v392, 4294901760
        %1217 = vmatprep.subr.mxu0 %v1216
        %v1218 = vand.u32 %v391, 4294901760
        %1219 = vmatpush2.msra.mxu0 %v1218
        %v1220 = vand.u32 %v390, 4294901760
        %1221 = vmatprep.subr.mxu0 %v1220
        %v1222 = vand.u32 %v389, 4294901760
        %1223 = vmatpush2.msra.mxu0 %v1222
        %v1224 = vand.u32 %v388, 4294901760
        %1225 = vmatprep.subr.mxu0 %v1224
        %v1226 = vand.u32 %v387, 4294901760
        %1227 = vmatpush2.msra.mxu0 %v1226
        %v1228 = vand.u32 %v386, 4294901760
        %1229 = vmatprep.subr.mxu0 %v1228
        %v1230 = vand.u32 %v385, 4294901760
        %1231 = vmatpush2.msra.mxu0 %v1230
        %v1232 = vand.u32 %v384, 4294901760
        %1233 = vmatprep.subr.mxu0 %v1232
        %v1234 = vand.u32 %v383, 4294901760
        %1235 = vmatpush2.msra.mxu0 %v1234
        %v1236 = vand.u32 %v382, 4294901760
        %1237 = vmatprep.subr.mxu0 %v1236
        %v1238 = vand.u32 %v381, 4294901760
        %1239 = vmatpush2.msra.mxu0 %v1238
        %v1240 = vand.u32 %v380, 4294901760
        %1241 = vmatprep.subr.mxu0 %v1240
        %v1242 = vand.u32 %v379, 4294901760
        %1243 = vmatpush2.msra.mxu0 %v1242
        %v1244 = vand.u32 %v378, 4294901760
        %1245 = vmatprep.subr.mxu0 %v1244
        %v1246 = vand.u32 %v377, 4294901760
        %1247 = vmatpush2.msra.mxu0 %v1246
        %v1248 = vand.u32 %v376, 4294901760
        %1249 = vmatprep.subr.mxu0 %v1248
        %v1250 = vand.u32 %v375, 4294901760
        %1251 = vmatpush2.msra.mxu0 %v1250
        %v1252 = vand.u32 %v374, 4294901760
        %1253 = vmatprep.subr.mxu0 %v1252
        %v1254 = vand.u32 %v373, 4294901760
        %1255 = vmatpush2.msra.mxu0 %v1254
        %v1256 = vand.u32 %v372, 4294901760
        %1257 = vmatprep.subr.mxu0 %v1256
        %v1258 = vand.u32 %v371, 4294901760
        %1259 = vmatpush2.msra.mxu0 %v1258
        %v1260 = vand.u32 %v370, 4294901760
        %1261 = vmatprep.subr.mxu0 %v1260
        %v1262 = vand.u32 %v369, 4294901760
        %1263 = vmatpush2.msra.mxu0 %v1262
        %v1264 = vand.u32 %v368, 4294901760
        %1265 = vmatprep.subr.mxu0 %v1264
        %v1266 = vand.u32 %v367, 4294901760
        %1267 = vmatpush2.msra.mxu0 %v1266
        %v1268 = vand.u32 %v334, 4294901760
        %v1269 = vsub.f32 %v334, %v1268
        %v1270 = vand.u32 %v1269, 4294901760
        %1271 = vmatprep.mubr.f32.mxu0 %v1270
        %v1272 = vand.u32 %v333, 4294901760
        %v1273 = vsub.f32 %v333, %v1272
        %v1274 = vand.u32 %v1273, 4294901760
        %1275 = vmatmul.mubr.f32.gmra.mxu0 %v1274
        %v1276 = vpop.f32.mrf.mxu0
        %v1277 = vadd.f32 %v1136, %v1276
        %v1278 = vpop.f32.mrf.mxu0
        %v1279 = vadd.f32 %v1138, %v1278
        %1280 = vdwg.mxu0
        %v1281 = vand.u32 %v366, 4294901760
        %v1282 = vsub.f32 %v366, %v1281
        %v1283 = vand.u32 %v1282, 4294901760
        %1284 = vmatprep.subr.mxu0 %v1283
        %v1285 = vand.u32 %v365, 4294901760
        %v1286 = vsub.f32 %v365, %v1285
        %v1287 = vand.u32 %v1286, 4294901760
        %1288 = vmatpush1.msra.mxu0 %v1287
        %v1289 = vand.u32 %v364, 4294901760
        %v1290 = vsub.f32 %v364, %v1289
        %v1291 = vand.u32 %v1290, 4294901760
        %1292 = vmatprep.subr.mxu0 %v1291
        %v1293 = vand.u32 %v363, 4294901760
        %v1294 = vsub.f32 %v363, %v1293
        %v1295 = vand.u32 %v1294, 4294901760
        %1296 = vmatpush1.msra.mxu0 %v1295
        %v1297 = vand.u32 %v362, 4294901760
        %v1298 = vsub.f32 %v362, %v1297
        %v1299 = vand.u32 %v1298, 4294901760
        %1300 = vmatprep.subr.mxu0 %v1299
        %v1301 = vand.u32 %v361, 4294901760
        %v1302 = vsub.f32 %v361, %v1301
        %v1303 = vand.u32 %v1302, 4294901760
        %1304 = vmatpush1.msra.mxu0 %v1303
        %v1305 = vand.u32 %v360, 4294901760
        %v1306 = vsub.f32 %v360, %v1305
        %v1307 = vand.u32 %v1306, 4294901760
        %1308 = vmatprep.subr.mxu0 %v1307
        %v1309 = vand.u32 %v359, 4294901760
        %v1310 = vsub.f32 %v359, %v1309
        %v1311 = vand.u32 %v1310, 4294901760
        %1312 = vmatpush1.msra.mxu0 %v1311
        %v1313 = vand.u32 %v358, 4294901760
        %v1314 = vsub.f32 %v358, %v1313
        %v1315 = vand.u32 %v1314, 4294901760
        %1316 = vmatprep.subr.mxu0 %v1315
        %v1317 = vand.u32 %v357, 4294901760
        %v1318 = vsub.f32 %v357, %v1317
        %v1319 = vand.u32 %v1318, 4294901760
        %1320 = vmatpush1.msra.mxu0 %v1319
        %v1321 = vand.u32 %v356, 4294901760
        %v1322 = vsub.f32 %v356, %v1321
        %v1323 = vand.u32 %v1322, 4294901760
        %1324 = vmatprep.subr.mxu0 %v1323
        %v1325 = vand.u32 %v355, 4294901760
        %v1326 = vsub.f32 %v355, %v1325
        %v1327 = vand.u32 %v1326, 4294901760
        %1328 = vmatpush1.msra.mxu0 %v1327
        %v1329 = vand.u32 %v354, 4294901760
        %v1330 = vsub.f32 %v354, %v1329
        %v1331 = vand.u32 %v1330, 4294901760
        %1332 = vmatprep.subr.mxu0 %v1331
        %v1333 = vand.u32 %v353, 4294901760
        %v1334 = vsub.f32 %v353, %v1333
        %v1335 = vand.u32 %v1334, 4294901760
        %1336 = vmatpush1.msra.mxu0 %v1335
        %v1337 = vand.u32 %v352, 4294901760
        %v1338 = vsub.f32 %v352, %v1337
        %v1339 = vand.u32 %v1338, 4294901760
        %1340 = vmatprep.subr.mxu0 %v1339
        %v1341 = vand.u32 %v351, 4294901760
        %v1342 = vsub.f32 %v351, %v1341
        %v1343 = vand.u32 %v1342, 4294901760
        %1344 = vmatpush1.msra.mxu0 %v1343
        %v1345 = vand.u32 %v350, 4294901760
        %v1346 = vsub.f32 %v350, %v1345
        %v1347 = vand.u32 %v1346, 4294901760
        %1348 = vmatprep.subr.mxu0 %v1347
        %v1349 = vand.u32 %v349, 4294901760
        %v1350 = vsub.f32 %v349, %v1349
        %v1351 = vand.u32 %v1350, 4294901760
        %1352 = vmatpush1.msra.mxu0 %v1351
        %v1353 = vand.u32 %v348, 4294901760
        %v1354 = vsub.f32 %v348, %v1353
        %v1355 = vand.u32 %v1354, 4294901760
        %1356 = vmatprep.subr.mxu0 %v1355
        %v1357 = vand.u32 %v347, 4294901760
        %v1358 = vsub.f32 %v347, %v1357
        %v1359 = vand.u32 %v1358, 4294901760
        %1360 = vmatpush1.msra.mxu0 %v1359
        %v1361 = vand.u32 %v346, 4294901760
        %v1362 = vsub.f32 %v346, %v1361
        %v1363 = vand.u32 %v1362, 4294901760
        %1364 = vmatprep.subr.mxu0 %v1363
        %v1365 = vand.u32 %v345, 4294901760
        %v1366 = vsub.f32 %v345, %v1365
        %v1367 = vand.u32 %v1366, 4294901760
        %1368 = vmatpush1.msra.mxu0 %v1367
        %v1369 = vand.u32 %v344, 4294901760
        %v1370 = vsub.f32 %v344, %v1369
        %v1371 = vand.u32 %v1370, 4294901760
        %1372 = vmatprep.subr.mxu0 %v1371
        %v1373 = vand.u32 %v343, 4294901760
        %v1374 = vsub.f32 %v343, %v1373
        %v1375 = vand.u32 %v1374, 4294901760
        %1376 = vmatpush1.msra.mxu0 %v1375
        %v1377 = vand.u32 %v342, 4294901760
        %v1378 = vsub.f32 %v342, %v1377
        %v1379 = vand.u32 %v1378, 4294901760
        %1380 = vmatprep.subr.mxu0 %v1379
        %v1381 = vand.u32 %v341, 4294901760
        %v1382 = vsub.f32 %v341, %v1381
        %v1383 = vand.u32 %v1382, 4294901760
        %1384 = vmatpush1.msra.mxu0 %v1383
        %v1385 = vand.u32 %v340, 4294901760
        %v1386 = vsub.f32 %v340, %v1385
        %v1387 = vand.u32 %v1386, 4294901760
        %1388 = vmatprep.subr.mxu0 %v1387
        %v1389 = vand.u32 %v339, 4294901760
        %v1390 = vsub.f32 %v339, %v1389
        %v1391 = vand.u32 %v1390, 4294901760
        %1392 = vmatpush1.msra.mxu0 %v1391
        %v1393 = vand.u32 %v338, 4294901760
        %v1394 = vsub.f32 %v338, %v1393
        %v1395 = vand.u32 %v1394, 4294901760
        %1396 = vmatprep.subr.mxu0 %v1395
        %v1397 = vand.u32 %v337, 4294901760
        %v1398 = vsub.f32 %v337, %v1397
        %v1399 = vand.u32 %v1398, 4294901760
        %1400 = vmatpush1.msra.mxu0 %v1399
        %v1401 = vand.u32 %v336, 4294901760
        %v1402 = vsub.f32 %v336, %v1401
        %v1403 = vand.u32 %v1402, 4294901760
        %1404 = vmatprep.subr.mxu0 %v1403
        %v1405 = vand.u32 %v335, 4294901760
        %v1406 = vsub.f32 %v335, %v1405
        %v1407 = vand.u32 %v1406, 4294901760
        %1408 = vmatpush1.msra.mxu0 %v1407
        %v1409 = vand.u32 %v398, 4294901760
        %v1410 = vsub.f32 %v398, %v1409
        %v1411 = vand.u32 %v1410, 4294901760
        %1412 = vmatprep.subr.mxu0 %v1411
        %v1413 = vand.u32 %v397, 4294901760
        %v1414 = vsub.f32 %v397, %v1413
        %v1415 = vand.u32 %v1414, 4294901760
        %1416 = vmatpush2.msra.mxu0 %v1415
        %v1417 = vand.u32 %v396, 4294901760
        %v1418 = vsub.f32 %v396, %v1417
        %v1419 = vand.u32 %v1418, 4294901760
        %1420 = vmatprep.subr.mxu0 %v1419
        %v1421 = vand.u32 %v395, 4294901760
        %v1422 = vsub.f32 %v395, %v1421
        %v1423 = vand.u32 %v1422, 4294901760
        %1424 = vmatpush2.msra.mxu0 %v1423
        %v1425 = vand.u32 %v394, 4294901760
        %v1426 = vsub.f32 %v394, %v1425
        %v1427 = vand.u32 %v1426, 4294901760
        %1428 = vmatprep.subr.mxu0 %v1427
        %v1429 = vand.u32 %v393, 4294901760
        %v1430 = vsub.f32 %v393, %v1429
        %v1431 = vand.u32 %v1430, 4294901760
        %1432 = vmatpush2.msra.mxu0 %v1431
        %v1433 = vand.u32 %v392, 4294901760
        %v1434 = vsub.f32 %v392, %v1433
        %v1435 = vand.u32 %v1434, 4294901760
        %1436 = vmatprep.subr.mxu0 %v1435
        %v1437 = vand.u32 %v391, 4294901760
        %v1438 = vsub.f32 %v391, %v1437
        %v1439 = vand.u32 %v1438, 4294901760
        %1440 = vmatpush2.msra.mxu0 %v1439
        %v1441 = vand.u32 %v390, 4294901760
        %v1442 = vsub.f32 %v390, %v1441
        %v1443 = vand.u32 %v1442, 4294901760
        %1444 = vmatprep.subr.mxu0 %v1443
        %v1445 = vand.u32 %v389, 4294901760
        %v1446 = vsub.f32 %v389, %v1445
        %v1447 = vand.u32 %v1446, 4294901760
        %1448 = vmatpush2.msra.mxu0 %v1447
        %v1449 = vand.u32 %v388, 4294901760
        %v1450 = vsub.f32 %v388, %v1449
        %v1451 = vand.u32 %v1450, 4294901760
        %1452 = vmatprep.subr.mxu0 %v1451
        %v1453 = vand.u32 %v387, 4294901760
        %v1454 = vsub.f32 %v387, %v1453
        %v1455 = vand.u32 %v1454, 4294901760
        %1456 = vmatpush2.msra.mxu0 %v1455
        %v1457 = vand.u32 %v386, 4294901760
        %v1458 = vsub.f32 %v386, %v1457
        %v1459 = vand.u32 %v1458, 4294901760
        %1460 = vmatprep.subr.mxu0 %v1459
        %v1461 = vand.u32 %v385, 4294901760
        %v1462 = vsub.f32 %v385, %v1461
        %v1463 = vand.u32 %v1462, 4294901760
        %1464 = vmatpush2.msra.mxu0 %v1463
        %v1465 = vand.u32 %v384, 4294901760
        %v1466 = vsub.f32 %v384, %v1465
        %v1467 = vand.u32 %v1466, 4294901760
        %1468 = vmatprep.subr.mxu0 %v1467
        %v1469 = vand.u32 %v383, 4294901760
        %v1470 = vsub.f32 %v383, %v1469
        %v1471 = vand.u32 %v1470, 4294901760
        %1472 = vmatpush2.msra.mxu0 %v1471
        %v1473 = vand.u32 %v382, 4294901760
        %v1474 = vsub.f32 %v382, %v1473
        %v1475 = vand.u32 %v1474, 4294901760
        %1476 = vmatprep.subr.mxu0 %v1475
        %v1477 = vand.u32 %v381, 4294901760
        %v1478 = vsub.f32 %v381, %v1477
        %v1479 = vand.u32 %v1478, 4294901760
        %1480 = vmatpush2.msra.mxu0 %v1479
        %v1481 = vand.u32 %v380, 4294901760
        %v1482 = vsub.f32 %v380, %v1481
        %v1483 = vand.u32 %v1482, 4294901760
        %1484 = vmatprep.subr.mxu0 %v1483
        %v1485 = vand.u32 %v379, 4294901760
        %v1486 = vsub.f32 %v379, %v1485
        %v1487 = vand.u32 %v1486, 4294901760
        %1488 = vmatpush2.msra.mxu0 %v1487
        %v1489 = vand.u32 %v378, 4294901760
        %v1490 = vsub.f32 %v378, %v1489
        %v1491 = vand.u32 %v1490, 4294901760
        %1492 = vmatprep.subr.mxu0 %v1491
        %v1493 = vand.u32 %v377, 4294901760
        %v1494 = vsub.f32 %v377, %v1493
        %v1495 = vand.u32 %v1494, 4294901760
        %1496 = vmatpush2.msra.mxu0 %v1495
        %v1497 = vand.u32 %v376, 4294901760
        %v1498 = vsub.f32 %v376, %v1497
        %v1499 = vand.u32 %v1498, 4294901760
        %1500 = vmatprep.subr.mxu0 %v1499
        %v1501 = vand.u32 %v375, 4294901760
        %v1502 = vsub.f32 %v375, %v1501
        %v1503 = vand.u32 %v1502, 4294901760
        %1504 = vmatpush2.msra.mxu0 %v1503
        %v1505 = vand.u32 %v374, 4294901760
        %v1506 = vsub.f32 %v374, %v1505
        %v1507 = vand.u32 %v1506, 4294901760
        %1508 = vmatprep.subr.mxu0 %v1507
        %v1509 = vand.u32 %v373, 4294901760
        %v1510 = vsub.f32 %v373, %v1509
        %v1511 = vand.u32 %v1510, 4294901760
        %1512 = vmatpush2.msra.mxu0 %v1511
        %v1513 = vand.u32 %v372, 4294901760
        %v1514 = vsub.f32 %v372, %v1513
        %v1515 = vand.u32 %v1514, 4294901760
        %1516 = vmatprep.subr.mxu0 %v1515
        %v1517 = vand.u32 %v371, 4294901760
        %v1518 = vsub.f32 %v371, %v1517
        %v1519 = vand.u32 %v1518, 4294901760
        %1520 = vmatpush2.msra.mxu0 %v1519
        %v1521 = vand.u32 %v370, 4294901760
        %v1522 = vsub.f32 %v370, %v1521
        %v1523 = vand.u32 %v1522, 4294901760
        %1524 = vmatprep.subr.mxu0 %v1523
        %v1525 = vand.u32 %v369, 4294901760
        %v1526 = vsub.f32 %v369, %v1525
        %v1527 = vand.u32 %v1526, 4294901760
        %1528 = vmatpush2.msra.mxu0 %v1527
        %v1529 = vand.u32 %v368, 4294901760
        %v1530 = vsub.f32 %v368, %v1529
        %v1531 = vand.u32 %v1530, 4294901760
        %1532 = vmatprep.subr.mxu0 %v1531
        %v1533 = vand.u32 %v367, 4294901760
        %v1534 = vsub.f32 %v367, %v1533
        %v1535 = vand.u32 %v1534, 4294901760
        %1536 = vmatpush2.msra.mxu0 %v1535
        %v1537 = vand.u32 %v334, 4294901760
        %1538 = vmatprep.mubr.f32.mxu0 %v1537
        %v1539 = vand.u32 %v333, 4294901760
        %1540 = vmatmul.mubr.f32.gmra.mxu0 %v1539
        %v1541 = vpop.f32.mrf.mxu0
        %v1542 = vadd.f32 %v1277, %v1541
        %v1543 = vpop.f32.mrf.mxu0
        %v1544 = vadd.f32 %v1279, %v1543
        %1545 = vdwg.mxu0
        %v1546 = vand.u32 %v366, 4294901760
        %1547 = vmatprep.subr.mxu0 %v1546
        %v1548 = vand.u32 %v365, 4294901760
        %1549 = vmatpush1.msra.mxu0 %v1548
        %v1550 = vand.u32 %v364, 4294901760
        %1551 = vmatprep.subr.mxu0 %v1550
        %v1552 = vand.u32 %v363, 4294901760
        %1553 = vmatpush1.msra.mxu0 %v1552
        %v1554 = vand.u32 %v362, 4294901760
        %1555 = vmatprep.subr.mxu0 %v1554
        %v1556 = vand.u32 %v361, 4294901760
        %1557 = vmatpush1.msra.mxu0 %v1556
        %v1558 = vand.u32 %v360, 4294901760
        %1559 = vmatprep.subr.mxu0 %v1558
        %v1560 = vand.u32 %v359, 4294901760
        %1561 = vmatpush1.msra.mxu0 %v1560
        %v1562 = vand.u32 %v358, 4294901760
        %1563 = vmatprep.subr.mxu0 %v1562
        %v1564 = vand.u32 %v357, 4294901760
        %1565 = vmatpush1.msra.mxu0 %v1564
        %v1566 = vand.u32 %v356, 4294901760
        %1567 = vmatprep.subr.mxu0 %v1566
        %v1568 = vand.u32 %v355, 4294901760
        %1569 = vmatpush1.msra.mxu0 %v1568
        %v1570 = vand.u32 %v354, 4294901760
        %1571 = vmatprep.subr.mxu0 %v1570
        %v1572 = vand.u32 %v353, 4294901760
        %1573 = vmatpush1.msra.mxu0 %v1572
        %v1574 = vand.u32 %v352, 4294901760
        %1575 = vmatprep.subr.mxu0 %v1574
        %v1576 = vand.u32 %v351, 4294901760
        %1577 = vmatpush1.msra.mxu0 %v1576
        %v1578 = vand.u32 %v350, 4294901760
        %1579 = vmatprep.subr.mxu0 %v1578
        %v1580 = vand.u32 %v349, 4294901760
        %1581 = vmatpush1.msra.mxu0 %v1580
        %v1582 = vand.u32 %v348, 4294901760
        %1583 = vmatprep.subr.mxu0 %v1582
        %v1584 = vand.u32 %v347, 4294901760
        %1585 = vmatpush1.msra.mxu0 %v1584
        %v1586 = vand.u32 %v346, 4294901760
        %1587 = vmatprep.subr.mxu0 %v1586
        %v1588 = vand.u32 %v345, 4294901760
        %1589 = vmatpush1.msra.mxu0 %v1588
        %v1590 = vand.u32 %v344, 4294901760
        %1591 = vmatprep.subr.mxu0 %v1590
        %v1592 = vand.u32 %v343, 4294901760
        %1593 = vmatpush1.msra.mxu0 %v1592
        %v1594 = vand.u32 %v342, 4294901760
        %1595 = vmatprep.subr.mxu0 %v1594
        %v1596 = vand.u32 %v341, 4294901760
        %1597 = vmatpush1.msra.mxu0 %v1596
        %v1598 = vand.u32 %v340, 4294901760
        %1599 = vmatprep.subr.mxu0 %v1598
        %v1600 = vand.u32 %v339, 4294901760
        %1601 = vmatpush1.msra.mxu0 %v1600
        %v1602 = vand.u32 %v338, 4294901760
        %1603 = vmatprep.subr.mxu0 %v1602
        %v1604 = vand.u32 %v337, 4294901760
        %1605 = vmatpush1.msra.mxu0 %v1604
        %v1606 = vand.u32 %v336, 4294901760
        %1607 = vmatprep.subr.mxu0 %v1606
        %v1608 = vand.u32 %v335, 4294901760
        %1609 = vmatpush1.msra.mxu0 %v1608
        %v1610 = vand.u32 %v398, 4294901760
        %1611 = vmatprep.subr.mxu0 %v1610
        %v1612 = vand.u32 %v397, 4294901760
        %1613 = vmatpush2.msra.mxu0 %v1612
        %v1614 = vand.u32 %v396, 4294901760
        %1615 = vmatprep.subr.mxu0 %v1614
        %v1616 = vand.u32 %v395, 4294901760
        %1617 = vmatpush2.msra.mxu0 %v1616
        %v1618 = vand.u32 %v394, 4294901760
        %1619 = vmatprep.subr.mxu0 %v1618
        %v1620 = vand.u32 %v393, 4294901760
        %1621 = vmatpush2.msra.mxu0 %v1620
        %v1622 = vand.u32 %v392, 4294901760
        %1623 = vmatprep.subr.mxu0 %v1622
        %v1624 = vand.u32 %v391, 4294901760
        %1625 = vmatpush2.msra.mxu0 %v1624
        %v1626 = vand.u32 %v390, 4294901760
        %1627 = vmatprep.subr.mxu0 %v1626
        %v1628 = vand.u32 %v389, 4294901760
        %1629 = vmatpush2.msra.mxu0 %v1628
        %v1630 = vand.u32 %v388, 4294901760
        %1631 = vmatprep.subr.mxu0 %v1630
        %v1632 = vand.u32 %v387, 4294901760
        %1633 = vmatpush2.msra.mxu0 %v1632
        %v1634 = vand.u32 %v386, 4294901760
        %1635 = vmatprep.subr.mxu0 %v1634
        %v1636 = vand.u32 %v385, 4294901760
        %1637 = vmatpush2.msra.mxu0 %v1636
        %v1638 = vand.u32 %v384, 4294901760
        %1639 = vmatprep.subr.mxu0 %v1638
        %v1640 = vand.u32 %v383, 4294901760
        %1641 = vmatpush2.msra.mxu0 %v1640
        %v1642 = vand.u32 %v382, 4294901760
        %1643 = vmatprep.subr.mxu0 %v1642
        %v1644 = vand.u32 %v381, 4294901760
        %1645 = vmatpush2.msra.mxu0 %v1644
        %v1646 = vand.u32 %v380, 4294901760
        %1647 = vmatprep.subr.mxu0 %v1646
        %v1648 = vand.u32 %v379, 4294901760
        %1649 = vmatpush2.msra.mxu0 %v1648
        %v1650 = vand.u32 %v378, 4294901760
        %1651 = vmatprep.subr.mxu0 %v1650
        %v1652 = vand.u32 %v377, 4294901760
        %1653 = vmatpush2.msra.mxu0 %v1652
        %v1654 = vand.u32 %v376, 4294901760
        %1655 = vmatprep.subr.mxu0 %v1654
        %v1656 = vand.u32 %v375, 4294901760
        %1657 = vmatpush2.msra.mxu0 %v1656
        %v1658 = vand.u32 %v374, 4294901760
        %1659 = vmatprep.subr.mxu0 %v1658
        %v1660 = vand.u32 %v373, 4294901760
        %1661 = vmatpush2.msra.mxu0 %v1660
        %v1662 = vand.u32 %v372, 4294901760
        %1663 = vmatprep.subr.mxu0 %v1662
        %v1664 = vand.u32 %v371, 4294901760
        %1665 = vmatpush2.msra.mxu0 %v1664
        %v1666 = vand.u32 %v370, 4294901760
        %1667 = vmatprep.subr.mxu0 %v1666
        %v1668 = vand.u32 %v369, 4294901760
        %1669 = vmatpush2.msra.mxu0 %v1668
        %v1670 = vand.u32 %v368, 4294901760
        %1671 = vmatprep.subr.mxu0 %v1670
        %v1672 = vand.u32 %v367, 4294901760
        %1673 = vmatpush2.msra.mxu0 %v1672
        %v1674 = vand.u32 %v334, 4294901760
        %1675 = vmatprep.mubr.f32.mxu0 %v1674
        %v1676 = vand.u32 %v333, 4294901760
        %1677 = vmatmul.mubr.f32.gmra.mxu0 %v1676
        %v1678 = vpop.f32.mrf.mxu0
        %v1679 = vadd.f32 %v1542, %v1678
        %v1680 = vpop.f32.mrf.mxu0
        %v1681 = vadd.f32 %v1544, %v1680
        %1682 = vdwg.mxu0
        %v1683 = vld [vmem:[%s314] sm:$0xff]
        %v1684 = vld [vmem:[%s318] sm:$0xff]
        %1686 = vset.pattern.permute.xlu0 0
        %1687 = vperm.xlu0 %1686, %v1684
        %v1688 = vpop.permute.xlu0 %1687
        %vm1690 = vcmask 64512
        %v1692 = vsel %vm1690, %v1683, 0
        %1694 = vmatprep.subr.mxu0 0.0
        %1695 = vmatpush1.msra.mxu0 0.0
        %1696 = vmatprep.subr.mxu0 0.0
        %1697 = vmatpush1.msra.mxu0 0.0
        %1698 = vmatprep.subr.mxu0 0.0
        %1699 = vmatpush1.msra.mxu0 0.0
        %1700 = vmatprep.subr.mxu0 0.0
        %1701 = vmatpush1.msra.mxu0 0.0
        %1702 = vmatprep.subr.mxu0 0.0
        %1703 = vmatpush1.msra.mxu0 0.0
        %1704 = vmatprep.subr.mxu0 0.0
        %1705 = vmatpush1.msra.mxu0 0.0
        %1706 = vmatprep.subr.mxu0 0.0
        %1707 = vmatpush1.msra.mxu0 0.0
        %1708 = vmatprep.subr.mxu0 0.0
        %1709 = vmatpush1.msra.mxu0 0.0
        %1710 = vmatprep.subr.mxu0 0.0
        %1711 = vmatpush1.msra.mxu0 0.0
        %1712 = vmatprep.subr.mxu0 0.0
        %1713 = vmatpush1.msra.mxu0 0.0
        %1714 = vmatprep.subr.mxu0 0.0
        %1715 = vmatpush1.msra.mxu0 0.0
        %1716 = vmatprep.subr.mxu0 0.0
        %1717 = vmatpush1.msra.mxu0 0.0
        %1718 = vmatprep.subr.mxu0 0.0
        %1719 = vmatpush1.msra.mxu0 0.0
        %1720 = vmatprep.subr.mxu0 0.0
        %1721 = vmatpush1.msra.mxu0 0.0
        %1722 = vmatprep.subr.mxu0 0.0
        %1723 = vmatpush1.msra.mxu0 0.0
        %v1724 = vand.u32 %v1681, 4294901760
        %1725 = vmatprep.subr.mxu0 %v1724
        %v1726 = vand.u32 %v1679, 4294901760
        %1727 = vmatpush1.msra.mxu0 %v1726
        %1728 = vmatprep.subr.mxu0 0.0
        %1729 = vmatpush2.msra.mxu0 0.0
        %1730 = vmatprep.subr.mxu0 0.0
        %1731 = vmatpush2.msra.mxu0 0.0
        %1732 = vmatprep.subr.mxu0 0.0
        %1733 = vmatpush2.msra.mxu0 0.0
        %1734 = vmatprep.subr.mxu0 0.0
        %1735 = vmatpush2.msra.mxu0 0.0
        %1736 = vmatprep.subr.mxu0 0.0
        %1737 = vmatpush2.msra.mxu0 0.0
        %1738 = vmatprep.subr.mxu0 0.0
        %1739 = vmatpush2.msra.mxu0 0.0
        %1740 = vmatprep.subr.mxu0 0.0
        %1741 = vmatpush2.msra.mxu0 0.0
        %1742 = vmatprep.subr.mxu0 0.0
        %1743 = vmatpush2.msra.mxu0 0.0
        %1744 = vmatprep.subr.mxu0 0.0
        %1745 = vmatpush2.msra.mxu0 0.0
        %1746 = vmatprep.subr.mxu0 0.0
        %1747 = vmatpush2.msra.mxu0 0.0
        %1748 = vmatprep.subr.mxu0 0.0
        %1749 = vmatpush2.msra.mxu0 0.0
        %1750 = vmatprep.subr.mxu0 0.0
        %1751 = vmatpush2.msra.mxu0 0.0
        %1752 = vmatprep.subr.mxu0 0.0
        %1753 = vmatpush2.msra.mxu0 0.0
        %1754 = vmatprep.subr.mxu0 0.0
        %1755 = vmatpush2.msra.mxu0 0.0
        %1756 = vmatprep.subr.mxu0 0.0
        %1757 = vmatpush2.msra.mxu0 0.0
        %1758 = vmatprep.subr.mxu0 0.0
        %1759 = vmatpush2.msra.mxu0 0.0
        %1760 = vmatprep.mubr.f32.mxu0 0.0
        %v1761 = vand.u32 %v1692, 4294901760
        %v1762 = vsub.f32 %v1692, %v1761
        %v1763 = vand.u32 %v1762, 4294901760
        %v1764 = vsub.f32 %v1762, %v1763
        %v1765 = vand.u32 %v1764, 4294901760
        %1766 = vmatmul.mubr.f32.gmra.mxu0 %v1765
        %v1767 = vpop.f32.mrf.mxu0
        %v1768 = vadd.f32 %v1688, %v1767
        %v1769 = vpop.f32.mrf.mxu0
        %v1770 = vadd.f32 %v1688, %v1769
        %1771 = vdwg.mxu0
        %1772 = vmatprep.subr.mxu0 0.0
        %1773 = vmatpush1.msra.mxu0 0.0
        %1774 = vmatprep.subr.mxu0 0.0
        %1775 = vmatpush1.msra.mxu0 0.0
        %1776 = vmatprep.subr.mxu0 0.0
        %1777 = vmatpush1.msra.mxu0 0.0
        %1778 = vmatprep.subr.mxu0 0.0
        %1779 = vmatpush1.msra.mxu0 0.0
        %1780 = vmatprep.subr.mxu0 0.0
        %1781 = vmatpush1.msra.mxu0 0.0
        %1782 = vmatprep.subr.mxu0 0.0
        %1783 = vmatpush1.msra.mxu0 0.0
        %1784 = vmatprep.subr.mxu0 0.0
        %1785 = vmatpush1.msra.mxu0 0.0
        %1786 = vmatprep.subr.mxu0 0.0
        %1787 = vmatpush1.msra.mxu0 0.0
        %1788 = vmatprep.subr.mxu0 0.0
        %1789 = vmatpush1.msra.mxu0 0.0
        %1790 = vmatprep.subr.mxu0 0.0
        %1791 = vmatpush1.msra.mxu0 0.0
        %1792 = vmatprep.subr.mxu0 0.0
        %1793 = vmatpush1.msra.mxu0 0.0
        %1794 = vmatprep.subr.mxu0 0.0
        %1795 = vmatpush1.msra.mxu0 0.0
        %1796 = vmatprep.subr.mxu0 0.0
        %1797 = vmatpush1.msra.mxu0 0.0
        %1798 = vmatprep.subr.mxu0 0.0
        %1799 = vmatpush1.msra.mxu0 0.0
        %1800 = vmatprep.subr.mxu0 0.0
        %1801 = vmatpush1.msra.mxu0 0.0
        %v1802 = vand.u32 %v1681, 4294901760
        %v1803 = vsub.f32 %v1681, %v1802
        %v1804 = vand.u32 %v1803, 4294901760
        %v1805 = vsub.f32 %v1803, %v1804
        %v1806 = vand.u32 %v1805, 4294901760
        %1807 = vmatprep.subr.mxu0 %v1806
        %v1808 = vand.u32 %v1679, 4294901760
        %v1809 = vsub.f32 %v1679, %v1808
        %v1810 = vand.u32 %v1809, 4294901760
        %v1811 = vsub.f32 %v1809, %v1810
        %v1812 = vand.u32 %v1811, 4294901760
        %1813 = vmatpush1.msra.mxu0 %v1812
        %1814 = vmatprep.subr.mxu0 0.0
        %1815 = vmatpush2.msra.mxu0 0.0
        %1816 = vmatprep.subr.mxu0 0.0
        %1817 = vmatpush2.msra.mxu0 0.0
        %1818 = vmatprep.subr.mxu0 0.0
        %1819 = vmatpush2.msra.mxu0 0.0
        %1820 = vmatprep.subr.mxu0 0.0
        %1821 = vmatpush2.msra.mxu0 0.0
        %1822 = vmatprep.subr.mxu0 0.0
        %1823 = vmatpush2.msra.mxu0 0.0
        %1824 = vmatprep.subr.mxu0 0.0
        %1825 = vmatpush2.msra.mxu0 0.0
        %1826 = vmatprep.subr.mxu0 0.0
        %1827 = vmatpush2.msra.mxu0 0.0
        %1828 = vmatprep.subr.mxu0 0.0
        %1829 = vmatpush2.msra.mxu0 0.0
        %1830 = vmatprep.subr.mxu0 0.0
        %1831 = vmatpush2.msra.mxu0 0.0
        %1832 = vmatprep.subr.mxu0 0.0
        %1833 = vmatpush2.msra.mxu0 0.0
        %1834 = vmatprep.subr.mxu0 0.0
        %1835 = vmatpush2.msra.mxu0 0.0
        %1836 = vmatprep.subr.mxu0 0.0
        %1837 = vmatpush2.msra.mxu0 0.0
        %1838 = vmatprep.subr.mxu0 0.0
        %1839 = vmatpush2.msra.mxu0 0.0
        %1840 = vmatprep.subr.mxu0 0.0
        %1841 = vmatpush2.msra.mxu0 0.0
        %1842 = vmatprep.subr.mxu0 0.0
        %1843 = vmatpush2.msra.mxu0 0.0
        %1844 = vmatprep.subr.mxu0 0.0
        %1845 = vmatpush2.msra.mxu0 0.0
        %1846 = vmatprep.mubr.f32.mxu0 0.0
        %v1847 = vand.u32 %v1692, 4294901760
        %1848 = vmatmul.mubr.f32.gmra.mxu0 %v1847
        %v1849 = vpop.f32.mrf.mxu0
        %v1850 = vadd.f32 %v1768, %v1849
        %v1851 = vpop.f32.mrf.mxu0
        %v1852 = vadd.f32 %v1770, %v1851
        %1853 = vdwg.mxu0
        %1854 = vmatprep.subr.mxu0 0.0
        %1855 = vmatpush1.msra.mxu0 0.0
        %1856 = vmatprep.subr.mxu0 0.0
        %1857 = vmatpush1.msra.mxu0 0.0
        %1858 = vmatprep.subr.mxu0 0.0
        %1859 = vmatpush1.msra.mxu0 0.0
        %1860 = vmatprep.subr.mxu0 0.0
        %1861 = vmatpush1.msra.mxu0 0.0
        %1862 = vmatprep.subr.mxu0 0.0
        %1863 = vmatpush1.msra.mxu0 0.0
        %1864 = vmatprep.subr.mxu0 0.0
        %1865 = vmatpush1.msra.mxu0 0.0
        %1866 = vmatprep.subr.mxu0 0.0
        %1867 = vmatpush1.msra.mxu0 0.0
        %1868 = vmatprep.subr.mxu0 0.0
        %1869 = vmatpush1.msra.mxu0 0.0
        %1870 = vmatprep.subr.mxu0 0.0
        %1871 = vmatpush1.msra.mxu0 0.0
        %1872 = vmatprep.subr.mxu0 0.0
        %1873 = vmatpush1.msra.mxu0 0.0
        %1874 = vmatprep.subr.mxu0 0.0
        %1875 = vmatpush1.msra.mxu0 0.0
        %1876 = vmatprep.subr.mxu0 0.0
        %1877 = vmatpush1.msra.mxu0 0.0
        %1878 = vmatprep.subr.mxu0 0.0
        %1879 = vmatpush1.msra.mxu0 0.0
        %1880 = vmatprep.subr.mxu0 0.0
        %1881 = vmatpush1.msra.mxu0 0.0
        %1882 = vmatprep.subr.mxu0 0.0
        %1883 = vmatpush1.msra.mxu0 0.0
        %v1884 = vand.u32 %v1681, 4294901760
        %v1885 = vsub.f32 %v1681, %v1884
        %1886 = vmatprep.subr.mxu0 %v1885
        %v1887 = vand.u32 %v1679, 4294901760
        %v1888 = vsub.f32 %v1679, %v1887
        %1889 = vmatpush1.msra.mxu0 %v1888
        %1890 = vmatprep.subr.mxu0 0.0
        %1891 = vmatpush2.msra.mxu0 0.0
        %1892 = vmatprep.subr.mxu0 0.0
        %1893 = vmatpush2.msra.mxu0 0.0
        %1894 = vmatprep.subr.mxu0 0.0
        %1895 = vmatpush2.msra.mxu0 0.0
        %1896 = vmatprep.subr.mxu0 0.0
        %1897 = vmatpush2.msra.mxu0 0.0
        %1898 = vmatprep.subr.mxu0 0.0
        %1899 = vmatpush2.msra.mxu0 0.0
        %1900 = vmatprep.subr.mxu0 0.0
        %1901 = vmatpush2.msra.mxu0 0.0
        %1902 = vmatprep.subr.mxu0 0.0
        %1903 = vmatpush2.msra.mxu0 0.0
        %1904 = vmatprep.subr.mxu0 0.0
        %1905 = vmatpush2.msra.mxu0 0.0
        %1906 = vmatprep.subr.mxu0 0.0
        %1907 = vmatpush2.msra.mxu0 0.0
        %1908 = vmatprep.subr.mxu0 0.0
        %1909 = vmatpush2.msra.mxu0 0.0
        %1910 = vmatprep.subr.mxu0 0.0
        %1911 = vmatpush2.msra.mxu0 0.0
        %1912 = vmatprep.subr.mxu0 0.0
        %1913 = vmatpush2.msra.mxu0 0.0
        %1914 = vmatprep.subr.mxu0 0.0
        %1915 = vmatpush2.msra.mxu0 0.0
        %1916 = vmatprep.subr.mxu0 0.0
        %1917 = vmatpush2.msra.mxu0 0.0
        %1918 = vmatprep.subr.mxu0 0.0
        %1919 = vmatpush2.msra.mxu0 0.0
        %1920 = vmatprep.subr.mxu0 0.0
        %1921 = vmatpush2.msra.mxu0 0.0
        %1922 = vmatprep.mubr.f32.mxu0 0.0
        %v1923 = vand.u32 %v1692, 4294901760
        %v1924 = vsub.f32 %v1692, %v1923
        %1925 = vmatmul.mubr.f32.gmra.mxu0 %v1924
        %v1926 = vpop.f32.mrf.mxu0
        %v1927 = vadd.f32 %v1850, %v1926
        %v1928 = vpop.f32.mrf.mxu0
        %v1929 = vadd.f32 %v1852, %v1928
        %1930 = vdwg.mxu0
        %1931 = vmatprep.subr.mxu0 0.0
        %1932 = vmatpush1.msra.mxu0 0.0
        %1933 = vmatprep.subr.mxu0 0.0
        %1934 = vmatpush1.msra.mxu0 0.0
        %1935 = vmatprep.subr.mxu0 0.0
        %1936 = vmatpush1.msra.mxu0 0.0
        %1937 = vmatprep.subr.mxu0 0.0
        %1938 = vmatpush1.msra.mxu0 0.0
        %1939 = vmatprep.subr.mxu0 0.0
        %1940 = vmatpush1.msra.mxu0 0.0
        %1941 = vmatprep.subr.mxu0 0.0
        %1942 = vmatpush1.msra.mxu0 0.0
        %1943 = vmatprep.subr.mxu0 0.0
        %1944 = vmatpush1.msra.mxu0 0.0
        %1945 = vmatprep.subr.mxu0 0.0
        %1946 = vmatpush1.msra.mxu0 0.0
        %1947 = vmatprep.subr.mxu0 0.0
        %1948 = vmatpush1.msra.mxu0 0.0
        %1949 = vmatprep.subr.mxu0 0.0
        %1950 = vmatpush1.msra.mxu0 0.0
        %1951 = vmatprep.subr.mxu0 0.0
        %1952 = vmatpush1.msra.mxu0 0.0
        %1953 = vmatprep.subr.mxu0 0.0
        %1954 = vmatpush1.msra.mxu0 0.0
        %1955 = vmatprep.subr.mxu0 0.0
        %1956 = vmatpush1.msra.mxu0 0.0
        %1957 = vmatprep.subr.mxu0 0.0
        %1958 = vmatpush1.msra.mxu0 0.0
        %1959 = vmatprep.subr.mxu0 0.0
        %1960 = vmatpush1.msra.mxu0 0.0
        %v1961 = vand.u32 %v1681, 4294901760
        %1962 = vmatprep.subr.mxu0 %v1961
        %v1963 = vand.u32 %v1679, 4294901760
        %1964 = vmatpush1.msra.mxu0 %v1963
        %1965 = vmatprep.subr.mxu0 0.0
        %1966 = vmatpush2.msra.mxu0 0.0
        %1967 = vmatprep.subr.mxu0 0.0
        %1968 = vmatpush2.msra.mxu0 0.0
        %1969 = vmatprep.subr.mxu0 0.0
        %1970 = vmatpush2.msra.mxu0 0.0
        %1971 = vmatprep.subr.mxu0 0.0
        %1972 = vmatpush2.msra.mxu0 0.0
        %1973 = vmatprep.subr.mxu0 0.0
        %1974 = vmatpush2.msra.mxu0 0.0
        %1975 = vmatprep.subr.mxu0 0.0
        %1976 = vmatpush2.msra.mxu0 0.0
        %1977 = vmatprep.subr.mxu0 0.0
        %1978 = vmatpush2.msra.mxu0 0.0
        %1979 = vmatprep.subr.mxu0 0.0
        %1980 = vmatpush2.msra.mxu0 0.0
        %1981 = vmatprep.subr.mxu0 0.0
        %1982 = vmatpush2.msra.mxu0 0.0
        %1983 = vmatprep.subr.mxu0 0.0
        %1984 = vmatpush2.msra.mxu0 0.0
        %1985 = vmatprep.subr.mxu0 0.0
        %1986 = vmatpush2.msra.mxu0 0.0
        %1987 = vmatprep.subr.mxu0 0.0
        %1988 = vmatpush2.msra.mxu0 0.0
        %1989 = vmatprep.subr.mxu0 0.0
        %1990 = vmatpush2.msra.mxu0 0.0
        %1991 = vmatprep.subr.mxu0 0.0
        %1992 = vmatpush2.msra.mxu0 0.0
        %1993 = vmatprep.subr.mxu0 0.0
        %1994 = vmatpush2.msra.mxu0 0.0
        %1995 = vmatprep.subr.mxu0 0.0
        %1996 = vmatpush2.msra.mxu0 0.0
        %1997 = vmatprep.mubr.f32.mxu0 0.0
        %v1998 = vand.u32 %v1692, 4294901760
        %v1999 = vsub.f32 %v1692, %v1998
        %v2000 = vand.u32 %v1999, 4294901760
        %2001 = vmatmul.mubr.f32.gmra.mxu0 %v2000
        %v2002 = vpop.f32.mrf.mxu0
        %v2003 = vadd.f32 %v1927, %v2002
        %v2004 = vpop.f32.mrf.mxu0
        %v2005 = vadd.f32 %v1929, %v2004
        %2006 = vdwg.mxu0
        %2007 = vmatprep.subr.mxu0 0.0
        %2008 = vmatpush1.msra.mxu0 0.0
        %2009 = vmatprep.subr.mxu0 0.0
        %2010 = vmatpush1.msra.mxu0 0.0
        %2011 = vmatprep.subr.mxu0 0.0
        %2012 = vmatpush1.msra.mxu0 0.0
        %2013 = vmatprep.subr.mxu0 0.0
        %2014 = vmatpush1.msra.mxu0 0.0
        %2015 = vmatprep.subr.mxu0 0.0
        %2016 = vmatpush1.msra.mxu0 0.0
        %2017 = vmatprep.subr.mxu0 0.0
        %2018 = vmatpush1.msra.mxu0 0.0
        %2019 = vmatprep.subr.mxu0 0.0
        %2020 = vmatpush1.msra.mxu0 0.0
        %2021 = vmatprep.subr.mxu0 0.0
        %2022 = vmatpush1.msra.mxu0 0.0
        %2023 = vmatprep.subr.mxu0 0.0
        %2024 = vmatpush1.msra.mxu0 0.0
        %2025 = vmatprep.subr.mxu0 0.0
        %2026 = vmatpush1.msra.mxu0 0.0
        %2027 = vmatprep.subr.mxu0 0.0
        %2028 = vmatpush1.msra.mxu0 0.0
        %2029 = vmatprep.subr.mxu0 0.0
        %2030 = vmatpush1.msra.mxu0 0.0
        %2031 = vmatprep.subr.mxu0 0.0
        %2032 = vmatpush1.msra.mxu0 0.0
        %2033 = vmatprep.subr.mxu0 0.0
        %2034 = vmatpush1.msra.mxu0 0.0
        %2035 = vmatprep.subr.mxu0 0.0
        %2036 = vmatpush1.msra.mxu0 0.0
        %v2037 = vand.u32 %v1681, 4294901760
        %v2038 = vsub.f32 %v1681, %v2037
        %v2039 = vand.u32 %v2038, 4294901760
        %2040 = vmatprep.subr.mxu0 %v2039
        %v2041 = vand.u32 %v1679, 4294901760
        %v2042 = vsub.f32 %v1679, %v2041
        %v2043 = vand.u32 %v2042, 4294901760
        %2044 = vmatpush1.msra.mxu0 %v2043
        %2045 = vmatprep.subr.mxu0 0.0
        %2046 = vmatpush2.msra.mxu0 0.0
        %2047 = vmatprep.subr.mxu0 0.0
        %2048 = vmatpush2.msra.mxu0 0.0
        %2049 = vmatprep.subr.mxu0 0.0
        %2050 = vmatpush2.msra.mxu0 0.0
        %2051 = vmatprep.subr.mxu0 0.0
        %2052 = vmatpush2.msra.mxu0 0.0
        %2053 = vmatprep.subr.mxu0 0.0
        %2054 = vmatpush2.msra.mxu0 0.0
        %2055 = vmatprep.subr.mxu0 0.0
        %2056 = vmatpush2.msra.mxu0 0.0
        %2057 = vmatprep.subr.mxu0 0.0
        %2058 = vmatpush2.msra.mxu0 0.0
        %2059 = vmatprep.subr.mxu0 0.0
        %2060 = vmatpush2.msra.mxu0 0.0
        %2061 = vmatprep.subr.mxu0 0.0
        %2062 = vmatpush2.msra.mxu0 0.0
        %2063 = vmatprep.subr.mxu0 0.0
        %2064 = vmatpush2.msra.mxu0 0.0
        %2065 = vmatprep.subr.mxu0 0.0
        %2066 = vmatpush2.msra.mxu0 0.0
        %2067 = vmatprep.subr.mxu0 0.0
        %2068 = vmatpush2.msra.mxu0 0.0
        %2069 = vmatprep.subr.mxu0 0.0
        %2070 = vmatpush2.msra.mxu0 0.0
        %2071 = vmatprep.subr.mxu0 0.0
        %2072 = vmatpush2.msra.mxu0 0.0
        %2073 = vmatprep.subr.mxu0 0.0
        %2074 = vmatpush2.msra.mxu0 0.0
        %2075 = vmatprep.subr.mxu0 0.0
        %2076 = vmatpush2.msra.mxu0 0.0
        %2077 = vmatprep.mubr.f32.mxu0 0.0
        %v2078 = vand.u32 %v1692, 4294901760
        %2079 = vmatmul.mubr.f32.gmra.mxu0 %v2078
        %v2080 = vpop.f32.mrf.mxu0
        %v2081 = vadd.f32 %v2003, %v2080
        %v2082 = vpop.f32.mrf.mxu0
        %v2083 = vadd.f32 %v2005, %v2082
        %2084 = vdwg.mxu0
        %2085 = vmatprep.subr.mxu0 0.0
        %2086 = vmatpush1.msra.mxu0 0.0
        %2087 = vmatprep.subr.mxu0 0.0
        %2088 = vmatpush1.msra.mxu0 0.0
        %2089 = vmatprep.subr.mxu0 0.0
        %2090 = vmatpush1.msra.mxu0 0.0
        %2091 = vmatprep.subr.mxu0 0.0
        %2092 = vmatpush1.msra.mxu0 0.0
        %2093 = vmatprep.subr.mxu0 0.0
        %2094 = vmatpush1.msra.mxu0 0.0
        %2095 = vmatprep.subr.mxu0 0.0
        %2096 = vmatpush1.msra.mxu0 0.0
        %2097 = vmatprep.subr.mxu0 0.0
        %2098 = vmatpush1.msra.mxu0 0.0
        %2099 = vmatprep.subr.mxu0 0.0
        %2100 = vmatpush1.msra.mxu0 0.0
        %2101 = vmatprep.subr.mxu0 0.0
        %2102 = vmatpush1.msra.mxu0 0.0
        %2103 = vmatprep.subr.mxu0 0.0
        %2104 = vmatpush1.msra.mxu0 0.0
        %2105 = vmatprep.subr.mxu0 0.0
        %2106 = vmatpush1.msra.mxu0 0.0
        %2107 = vmatprep.subr.mxu0 0.0
        %2108 = vmatpush1.msra.mxu0 0.0
        %2109 = vmatprep.subr.mxu0 0.0
        %2110 = vmatpush1.msra.mxu0 0.0
        %2111 = vmatprep.subr.mxu0 0.0
        %2112 = vmatpush1.msra.mxu0 0.0
        %2113 = vmatprep.subr.mxu0 0.0
        %2114 = vmatpush1.msra.mxu0 0.0
        %v2115 = vand.u32 %v1681, 4294901760
        %2116 = vmatprep.subr.mxu0 %v2115
        %v2117 = vand.u32 %v1679, 4294901760
        %2118 = vmatpush1.msra.mxu0 %v2117
        %2119 = vmatprep.subr.mxu0 0.0
        %2120 = vmatpush2.msra.mxu0 0.0
        %2121 = vmatprep.subr.mxu0 0.0
        %2122 = vmatpush2.msra.mxu0 0.0
        %2123 = vmatprep.subr.mxu0 0.0
        %2124 = vmatpush2.msra.mxu0 0.0
        %2125 = vmatprep.subr.mxu0 0.0
        %2126 = vmatpush2.msra.mxu0 0.0
        %2127 = vmatprep.subr.mxu0 0.0
        %2128 = vmatpush2.msra.mxu0 0.0
        %2129 = vmatprep.subr.mxu0 0.0
        %2130 = vmatpush2.msra.mxu0 0.0
        %2131 = vmatprep.subr.mxu0 0.0
        %2132 = vmatpush2.msra.mxu0 0.0
        %2133 = vmatprep.subr.mxu0 0.0
        %2134 = vmatpush2.msra.mxu0 0.0
        %2135 = vmatprep.subr.mxu0 0.0
        %2136 = vmatpush2.msra.mxu0 0.0
        %2137 = vmatprep.subr.mxu0 0.0
        %2138 = vmatpush2.msra.mxu0 0.0
        %2139 = vmatprep.subr.mxu0 0.0
        %2140 = vmatpush2.msra.mxu0 0.0
        %2141 = vmatprep.subr.mxu0 0.0
        %2142 = vmatpush2.msra.mxu0 0.0
        %2143 = vmatprep.subr.mxu0 0.0
        %2144 = vmatpush2.msra.mxu0 0.0
        %2145 = vmatprep.subr.mxu0 0.0
        %2146 = vmatpush2.msra.mxu0 0.0
        %2147 = vmatprep.subr.mxu0 0.0
        %2148 = vmatpush2.msra.mxu0 0.0
        %2149 = vmatprep.subr.mxu0 0.0
        %2150 = vmatpush2.msra.mxu0 0.0
        %2151 = vmatprep.mubr.f32.mxu0 0.0
        %v2152 = vand.u32 %v1692, 4294901760
        %2153 = vmatmul.mubr.f32.gmra.mxu0 %v2152
        %v2154 = vpop.f32.mrf.mxu0
        %v2155 = vadd.f32 %v2081, %v2154
        %v2156 = vpop.f32.mrf.mxu0
        %v2157 = vadd.f32 %v2083, %v2156
        %2158 = vdwg.mxu0
        %v2159 = vxor.u32 %v2155, 2147483648
        %v2160 = vxor.u32 %v2157, 2147483648
        %v2161 = vmul.f32 %v2159, 1.442695
        %v2162 = vpow.pop %v2161
        %v2163 = vmul.f32 %v2160, 1.442695
        %v2164 = vpow.pop %v2163
        %v2165 = vadd.f32 %v2162, 1.0
        %v2166 = vadd.f32 %v2164, 1.0
        %v2167 = vrcp.pop %v2165
        %v2168 = vmul.f32 1.0, %v2167
        %v2169 = vrcp.pop %v2166
        %v2170 = vmul.f32 1.0, %v2169
        %v2171 = vmul.f32 %v2168, %v333
        %v2172 = vmul.f32 %v2170, %v334
        %v2173 = vadd.f32 %v2171, %v2172
        %2174 = vadd.xlane.f32.xlu0 %v2173
        %v2175 = vpop.xlane.xlu0 %2174
        %v2176 = vrot.slane %v2175, 4
        %v2177 = vadd.f32 %v2175, %v2176
        %v2178 = vrot.slane %v2177, 2
        %v2179 = vadd.f32 %v2177, %v2178
        %v2180 = vrot.slane %v2179, 1
        %v2181 = vadd.f32 %v2179, %v2180
        %s2182 = vtos %v2181
        %v2183 = vstv %s2182
        %vm2184 = vcmask 0
        %2185 = vst.msk [vmem:[%s325] sm:$0x1] %vm2184, %v2183
        %v2186 = vmul.f32 %v2171, %v2171
        %v2187 = vmul.f32 %v2172, %v2172
        %v2188 = vadd.f32 %v2186, %v2187
        %2189 = vadd.xlane.f32.xlu0 %v2188
        %v2190 = vpop.xlane.xlu0 %2189
        %v2191 = vrot.slane %v2190, 4
        %v2192 = vadd.f32 %v2190, %v2191
        %v2193 = vrot.slane %v2192, 2
        %v2194 = vadd.f32 %v2192, %v2193
        %v2195 = vrot.slane %v2194, 1
        %v2196 = vadd.f32 %v2194, %v2195
        %s2197 = vtos %v2196
        %v2198 = vstv %s2197
        %2199 = vst.msk [vmem:[%s332] sm:$0x1] %vm2184, %v2198
        %p2200 = scmp.lt.s32.totalorder %s25, 1
        %s2201 = scalar_select %p2200, %s25, 1
        %p2202 = scmp.lt.s32.totalorder %s26, 3
        %s2203 = scalar_select %p2202, %s26, 3
        %s2204 = smul.addr %s2201, 4
        %s2205 = sadd.s32 %s2203, %s2204
        %s2206 = scalar_lea.vmem %s4, %s2205
        %p2207 = scmp.lt.s32.totalorder %s25, 1
        %s2208 = scalar_select %p2207, %s25, 1
        %p2209 = scmp.lt.s32.totalorder %s26, 3
        %s2210 = scalar_select %p2209, %s26, 3
        %s2211 = smul.addr %s2208, 4
        %s2212 = sadd.s32 %s2210, %s2211
        %s2213 = scalar_lea.vmem %s5, %s2212
        // Predicated region
        $region45: #{tpu_custom_call.1} parent=35 // pred_check
          %p2214 = pneg %p154
        $region46: #{tpu_custom_call.1} parent=35 // pred_check_branch
          %2216 = sbr.rel (%p2214) target = $region48
        $region47: #{tpu_custom_call.1} parent=35 // pred_region
          _
        $region48: #{tpu_custom_call.1} parent=35 // pred_fallthru
          _
        // Predicated region
        $region49: #{tpu_custom_call.1} parent=35 // pred_check
          %p2217 = pneg %p182
        $region50: #{tpu_custom_call.1} parent=35 // pred_check_branch
          %2219 = sbr.rel (%p2217) target = $region52
        $region51: #{tpu_custom_call.1} parent=35 // pred_region
          _
        $region52: #{tpu_custom_call.1} parent=35 // pred_fallthru
          _
      $region36: #{tpu_custom_call.1} parent=5 // pred_fallthru
        _
      %p2220 = scmp.le.s32.totalorder 2, %s16
      // Predicated region
      $region53: #{tpu_custom_call.1} parent=5 // pred_check
        %p2221 = pneg %p2220
      $region54: #{tpu_custom_call.1} parent=5 // pred_check_branch
        %2223 = sbr.rel (%p2221) target = $region56
      $region55: #{tpu_custom_call.1} parent=5 // pred_region
        %s2224 = ssub.s32 %s16, 2
        // Predicated region
        $region57: #{tpu_custom_call.1} parent=55 // pred_check
          %p2225 = pneg %p160
        $region58: #{tpu_custom_call.1} parent=55 // pred_check_branch
          %2227 = sbr.rel (%p2225) target = $region60
        $region59: #{tpu_custom_call.1} parent=55 // pred_region
          %p2228 = scmp.lt.s32.totalorder %s27, 1
          %s2229 = scalar_select %p2228, %s27, 1
          %p2230 = scmp.lt.s32.totalorder %s28, 3
          %s2231 = scalar_select %p2230, %s28, 3
          %s2232 = smul.addr %s2229, 4
          %s2233 = sadd.s32 %s2231, %s2232
          %s2234 = scalar_lea.vmem %s4, %s2233
        $region60: #{tpu_custom_call.1} parent=55 // pred_fallthru
          _
        // Predicated region
        $region61: #{tpu_custom_call.1} parent=55 // pred_check
          %p2235 = pneg %p188
        $region62: #{tpu_custom_call.1} parent=55 // pred_check_branch
          %2237 = sbr.rel (%p2235) target = $region64
        $region63: #{tpu_custom_call.1} parent=55 // pred_region
          %p2238 = scmp.lt.s32.totalorder %s27, 1
          %s2239 = scalar_select %p2238, %s27, 1
          %p2240 = scmp.lt.s32.totalorder %s28, 3
          %s2241 = scalar_select %p2240, %s28, 3
          %s2242 = smul.addr %s2239, 4
          %s2243 = sadd.s32 %s2241, %s2242
          %s2244 = scalar_lea.vmem %s5, %s2243
        $region64: #{tpu_custom_call.1} parent=55 // pred_fallthru
          _
      $region56: #{tpu_custom_call.1} parent=5 // pred_fallthru
        _
    $region6: #{tpu_custom_call.1} parent=1 // loop_footer
      %s20 = sadd.s32 1, %s16
    $region7: #{tpu_custom_call.1} parent=1 // loop_footer_branch
      %15 = sbr.rel target = $region3
    $region8: #{tpu_custom_call.1} parent=1 // loop_exit
      _
    %2245 = vsyncpa [#allocation3], 1
    %s2246 = scalar_lea.sflag [#allocation3], 1
    %2247 = vsyncpa %s2246, 1
    %2248 = vsyncpa [#allocation5], 1

</llo_original>
